<compile_context>
chip_gen: v7x
topology: tpu7x:2x2x1
jax: 0.10.0
libtpu: 0.0.40
codegen_flags: <defaults>
</compile_context>

<pallas_src>
import math
import functools

import jax
import jax.numpy as jnp
from jax.experimental import pallas as pl
from jax.experimental.pallas import tpu as pltpu


LN_EPS = 1e-5  # PyTorch nn.LayerNorm default


# ----------------------------------------------------------------------------
# Fused forward kernel: projections + attention + out-proj + residual + LN
# ----------------------------------------------------------------------------
def _mha_kernel(q_in_ref, k_in_ref, v_in_ref,
                wq_ref, bq_ref, wk_ref, bk_ref, wv_ref, bv_ref,
                wo_ref, bo_ref, gamma_ref, beta_ref,
                out_ref, att_ref,
                kproj_ref, vproj_ref,
                *, h, d_k, d_v, scale):
    cdt = jnp.bfloat16

    # --- K/V projections: invariant across query tiles. Compute once per
    # batch element (qi == 0) into bf16 VMEM scratch and reuse. -------------
    @pl.when(pl.program_id(1) == 0)
    def _():
        x_k = k_in_ref[0].astype(cdt)                     # (nk, d_model)
        x_v = v_in_ref[0].astype(cdt)
        k_p = jnp.dot(x_k, wk_ref[...],
                      preferred_element_type=jnp.float32) + bk_ref[...]
        v_p = jnp.dot(x_v, wv_ref[...],
                      preferred_element_type=jnp.float32) + bv_ref[...]
        kproj_ref[...] = k_p.astype(cdt)                  # (nk, h*d_k)
        vproj_ref[...] = v_p.astype(cdt)                  # (nk, h*d_v)

    # --- Q projection for this tile (residual needs the f32 input). --------
    x_q = q_in_ref[0]                                     # (bq, d_model) f32
    q = jnp.dot(x_q.astype(cdt), wq_ref[...],
                preferred_element_type=jnp.float32) + bq_ref[...]
    q_bf = (q * scale).astype(cdt)                        # fold 1/sqrt(d_k) once

    k_all = kproj_ref[...]                                # (nk, h*d_k) bf16
    v_all = vproj_ref[...]                                # (nk, h*d_v) bf16
    wo_bf = wo_ref[...]                                   # (h*d_v, d_model) bf16

    bq_rows, d_model = x_q.shape
    o = jnp.zeros((bq_rows, d_model), jnp.float32)

    # Per-head attention, statically unrolled (h is small & static).  The
    # output projection is accumulated per head: no concat of narrow pieces,
    # every MXU result tile is full-lane-width (d_model), and no list of h
    # live head outputs is kept.
    for hd in range(h):
        q_h = q_bf[:, hd * d_k:(hd + 1) * d_k]            # (bq, d_k)
        k_h = k_all[:, hd * d_k:(hd + 1) * d_k]           # (nk, d_k)
        v_h = v_all[:, hd * d_v:(hd + 1) * d_v]           # (nk, d_v)

        # contract last dims of Q and K directly (no in-kernel transpose)
        s = jax.lax.dot_general(
            q_h, k_h, dimension_numbers=(((1,), (1,)), ((), ())),
            preferred_element_type=jnp.float32)           # (bq, nk)

        # numerically-stable softmax; exact divide (user-visible output)
        s_max = jnp.max(s, axis=-1, keepdims=True)
        e = jnp.exp(s - s_max)
        att_h = e / jnp.sum(e, axis=-1, keepdims=True)    # (bq, nk) f32

        att_ref[0, hd] = att_h.astype(att_ref.dtype)

        head_out = jnp.dot(att_h.astype(cdt), v_h,
                           preferred_element_type=jnp.float32)      # (bq, d_v)
        # sublane-aligned (d_v multiple of 8/16) weight slice, lane-dense out
        o = o + jnp.dot(head_out.astype(cdt),
                        wo_bf[hd * d_v:(hd + 1) * d_v, :],
                        preferred_element_type=jnp.float32)          # (bq, d_model)

    o = o + bo_ref[...]

    # residual + LayerNorm (dropout is identity in eval mode)
    y = x_q + o
    mean = jnp.mean(y, axis=-1, keepdims=True)
    yc = y - mean
    var = jnp.mean(yc * yc, axis=-1, keepdims=True)
    y_n = yc * jax.lax.rsqrt(var + LN_EPS)
    out_ref[0] = (y_n * gamma_ref[...] + beta_ref[...]).astype(out_ref.dtype)


def multi_head_attention_forward(queries, keys, values, params,
                                 *, h, d_k, d_v, block_q=256,
                                 att_dtype=jnp.float32):
    """queries (b,nq,dm), keys/values (b,nk,dm) -> (out (b,nq,dm), att (b,h,nq,nk))."""
    b_s, nq, d_model = queries.shape
    nk = keys.shape[1]
    bq = min(block_q, nq)
    grid = (b_s, pl.cdiv(nq, bq))

    (w_q, bias_q, w_k, bias_k, w_v, bias_v, w_o, bias_o, gamma, beta) = params

    # MXU operands in bf16 (f32 accumulation in-kernel); biases / LN stay f32.
    bf = jnp.bfloat16
    w_q_bf = w_q.astype(bf)
    w_k_bf = w_k.astype(bf)
    w_v_bf = w_v.astype(bf)
    w_o_bf = w_o.astype(bf)
    bias_q2 = bias_q.reshape(1, -1).astype(jnp.float32)
    bias_k2 = bias_k.reshape(1, -1).astype(jnp.float32)
    bias_v2 = bias_v.reshape(1, -1).astype(jnp.float32)
    bias_o2 = bias_o.reshape(1, -1).astype(jnp.float32)
    gamma2 = gamma.reshape(1, -1).astype(jnp.float32)
    beta2 = beta.reshape(1, -1).astype(jnp.float32)

    kernel = functools.partial(_mha_kernel, h=h, d_k=d_k, d_v=d_v,
                               scale=1.0 / math.sqrt(d_k))

    def full2d(shape):
        return pl.BlockSpec(shape, lambda b, qi: (0, 0))

    # Rough per-step VMEM estimate (double-buffered I/O blocks + scratch +
    # weights).  Only raise the scoped limit when we would exceed the default.
    est = 2 * (bq * d_model * 4                # queries tile
               + 2 * nk * d_model * 4          # keys + values tiles
               + bq * d_model * 4              # out tile
               + h * bq * nk * jnp.dtype(att_dtype).itemsize)  # att tile
    est += nk * (h * d_k + h * d_v) * 2        # bf16 K/V projection scratch
    est += 2 * 2 * (2 * d_model * h * d_k + d_model * h * d_v + h * d_v * d_model)
    cp_kwargs = dict(dimension_semantics=("parallel", "arbitrary"))
    if est > 32 * 1024 * 1024:
        cp_kwargs["vmem_limit_bytes"] = min(int(est * 1.25), 100 * 1024 * 1024)

    out, att = pl.pallas_call(
        kernel,
        out_shape=(jax.ShapeDtypeStruct((b_s, nq, d_model), jnp.float32),
                   jax.ShapeDtypeStruct((b_s, h, nq, nk), att_dtype)),
        grid=grid,
        in_specs=[
            pl.BlockSpec((1, bq, d_model), lambda b, qi: (b, qi, 0)),   # queries tile
            pl.BlockSpec((1, nk, d_model), lambda b, qi: (b, 0, 0)),    # keys (full)
            pl.BlockSpec((1, nk, d_model), lambda b, qi: (b, 0, 0)),    # values (full)
            full2d((d_model, h * d_k)), full2d((1, h * d_k)),           # w_q, b_q
            full2d((d_model, h * d_k)), full2d((1, h * d_k)),           # w_k, b_k
            full2d((d_model, h * d_v)), full2d((1, h * d_v)),           # w_v, b_v
            full2d((h * d_v, d_model)), full2d((1, d_model)),           # w_o, b_o
            full2d((1, d_model)), full2d((1, d_model)),                 # ln gamma, beta
        ],
        out_specs=(
            pl.BlockSpec((1, bq, d_model), lambda b, qi: (b, qi, 0)),
            pl.BlockSpec((1, h, bq, nk), lambda b, qi: (b, 0, qi, 0)),
        ),
        scratch_shapes=[
            pltpu.VMEM((nk, h * d_k), jnp.bfloat16),   # cached K projection
            pltpu.VMEM((nk, h * d_v), jnp.bfloat16),   # cached V projection
        ],
        compiler_params=pltpu.CompilerParams(**cp_kwargs),
    )(queries, keys, values,
      w_q_bf, bias_q2, w_k_bf, bias_k2, w_v_bf, bias_v2, w_o_bf, bias_o2,
      gamma2, beta2)
    return out, att


# ----------------------------------------------------------------------------
# Module (parameters + forward glue)
# ----------------------------------------------------------------------------
def xavier_uniform(key, fan_in, fan_out):
    a = math.sqrt(6.0 / (fan_in + fan_out))
    # stored as (d_in, d_out) so the kernel does x @ W (torch stores (out, in))
    return jax.random.uniform(key, (fan_in, fan_out), jnp.float32, -a, a)


class MultiHeadAttentionPallas:
    """Pallas port of MultiHeadAttention.

    Implements the default path: eval mode (dropout = identity),
    identity_map_reordering=False, can_be_stateful=False, no mask/weights.
    """

    def __init__(self, d_model, d_k, d_v, h, key):
        self.d_model, self.d_k, self.d_v, self.h = d_model, d_k, d_v, h
        ks = jax.random.split(key, 4)
        self.w_q = xavier_uniform(ks[0], d_model, h * d_k)
        self.w_k = xavier_uniform(ks[1], d_model, h * d_k)
        self.w_v = xavier_uniform(ks[2], d_model, h * d_v)
        self.w_o = xavier_uniform(ks[3], h * d_v, d_model)
        self.b_q = jnp.zeros((h * d_k,), jnp.float32)
        self.b_k = jnp.zeros((h * d_k,), jnp.float32)
        self.b_v = jnp.zeros((h * d_v,), jnp.float32)
        self.b_o = jnp.zeros((d_model,), jnp.float32)
        self.ln_gamma = jnp.ones((d_model,), jnp.float32)
        self.ln_beta = jnp.zeros((d_model,), jnp.float32)

    def __call__(self, queries, keys, values):
        params = (self.w_q, self.b_q, self.w_k, self.b_k, self.w_v, self.b_v,
                  self.w_o, self.b_o, self.ln_gamma, self.ln_beta)
        return multi_head_attention_forward(
            queries, keys, values, params,
            h=self.h, d_k=self.d_k, d_v=self.d_v)

    # pure-JAX f32 reference mirroring the PyTorch forward (for validation)
    def reference(self, queries, keys, values):
        d_k, d_v, h = self.d_k, self.d_v, self.h
        b_s, nq, _ = queries.shape
        nk = keys.shape[1]
        q = (queries @ self.w_q + self.b_q).reshape(b_s, nq, h, d_k).transpose(0, 2, 1, 3)
        k = (keys @ self.w_k + self.b_k).reshape(b_s, nk, h, d_k).transpose(0, 2, 3, 1)
        v = (values @ self.w_v + self.b_v).reshape(b_s, nk, h, d_v).transpose(0, 2, 1, 3)
        att = jnp.matmul(q, k) / math.sqrt(d_k)
        att = jax.nn.softmax(att, axis=-1)
        out = jnp.matmul(att, v).transpose(0, 2, 1, 3).reshape(b_s, nq, h * d_v)
        out = out @ self.w_o + self.b_o
        y = queries + out
        mean = jnp.mean(y, axis=-1, keepdims=True)
        var = jnp.var(y, axis=-1, keepdims=True)
        y = (y - mean) / jnp.sqrt(var + LN_EPS)
        return y * self.ln_gamma + self.ln_beta, att


if __name__ == "__main__":
    d_model, d_k, d_v, h = 32, 16, 16, 4
    b_s, nq, nk = 2, 8, 8

    key = jax.random.PRNGKey(0)
    k_params, k_bias, k_q, k_k, k_v = jax.random.split(key, 5)

    module = MultiHeadAttentionPallas(d_model, d_k, d_v, h, k_params)

    # Perturb biases / LayerNorm affine so the validation exercises those paths
    # (the spec's init sets them to 0 / 1, which would hide bugs).
    kb = jax.random.split(k_bias, 6)
    module.b_q = 0.1 * jax.random.normal(kb[0], (h * d_k,), jnp.float32)
    module.b_k = 0.1 * jax.random.normal(kb[1], (h * d_k,), jnp.float32)
    module.b_v = 0.1 * jax.random.normal(kb[2], (h * d_v,), jnp.float32)
    module.b_o = 0.1 * jax.random.normal(kb[3], (d_model,), jnp.float32)
    module.ln_gamma = 1.0 + 0.1 * jax.random.normal(kb[4], (d_model,), jnp.float32)
    module.ln_beta = 0.1 * jax.random.normal(kb[5], (d_model,), jnp.float32)

    queries = jax.random.normal(k_q, (b_s, nq, d_model), jnp.float32)
    keys = jax.random.normal(k_k, (b_s, nk, d_model), jnp.float32)
    values = jax.random.normal(k_v, (b_s, nk, d_model), jnp.float32)

    out, att = module(queries, keys, values)
    out = jax.block_until_ready(out)
    att = jax.block_until_ready(att)

    ref_out, ref_att = module.reference(queries, keys, values)
    assert out.shape == (b_s, nq, d_model)
    assert att.shape == (b_s, h, nq, nk)
    # tolerances relaxed vs the f32 reference because MXU operands are bf16
    # (f32 accumulation); softmax rows still sum to 1 exactly (exact divide).
    assert jnp.allclose(att, ref_att, atol=2e-2, rtol=2e-2), "attention mismatch vs reference"
    assert jnp.allclose(out, ref_out, atol=5e-2, rtol=5e-2), "output mismatch vs reference"
    row_sums = jnp.sum(att, axis=-1)
    assert jnp.allclose(row_sums, jnp.ones_like(row_sums), atol=1e-5), "att rows must sum to 1"

    print("KERNEL_OK")
</pallas_src>

<mosaic_0001>
module attributes {stable_mosaic.version = 11 : i64} {
  func.func @_mha_kernel(%arg0: i32, %arg1: i32, %arg2: memref<1x8x32xf32, #tpu.memory_space<vmem>>, %arg3: memref<1x8x32xf32, #tpu.memory_space<vmem>>, %arg4: memref<1x8x32xf32, #tpu.memory_space<vmem>>, %arg5: memref<32x64xbf16, #tpu.memory_space<vmem>>, %arg6: memref<1x64xf32, #tpu.memory_space<vmem>>, %arg7: memref<32x64xbf16, #tpu.memory_space<vmem>>, %arg8: memref<1x64xf32, #tpu.memory_space<vmem>>, %arg9: memref<32x64xbf16, #tpu.memory_space<vmem>>, %arg10: memref<1x64xf32, #tpu.memory_space<vmem>>, %arg11: memref<64x32xbf16, #tpu.memory_space<vmem>>, %arg12: memref<1x32xf32, #tpu.memory_space<vmem>>, %arg13: memref<1x32xf32, #tpu.memory_space<vmem>>, %arg14: memref<1x32xf32, #tpu.memory_space<vmem>>, %arg15: memref<1x8x32xf32, #tpu.memory_space<vmem>>, %arg16: memref<1x4x8x8xf32, #tpu.memory_space<vmem>>, %arg17: memref<8x64xbf16, #tpu.memory_space<vmem>>, %arg18: memref<8x64xbf16, #tpu.memory_space<vmem>>) attributes {dimension_semantics = [#tpu.dimension_semantics<parallel>, #tpu.dimension_semantics<arbitrary>], iteration_bounds = array<i64: 2, 1>, scalar_prefetch = 0 : i64, scratch_operands = 2 : i64, tpu.core_type = #tpu.core_type<tc>, window_params = [{transform_indices = @transform_0, window_bounds = array<i64: 1, 8, 32>}, {transform_indices = @transform_1, window_bounds = array<i64: 1, 8, 32>}, {transform_indices = @transform_2, window_bounds = array<i64: 1, 8, 32>}, {pipeline_mode = #tpu.pipeline_mode<synchronous>, transform_indices = @transform_3, window_bounds = array<i64: 32, 64>}, {pipeline_mode = #tpu.pipeline_mode<synchronous>, transform_indices = @transform_4, window_bounds = array<i64: 1, 64>}, {pipeline_mode = #tpu.pipeline_mode<synchronous>, transform_indices = @transform_5, window_bounds = array<i64: 32, 64>}, {pipeline_mode = #tpu.pipeline_mode<synchronous>, transform_indices = @transform_6, window_bounds = array<i64: 1, 64>}, {pipeline_mode = #tpu.pipeline_mode<synchronous>, transform_indices = @transform_7, window_bounds = array<i64: 32, 64>}, {pipeline_mode = #tpu.pipeline_mode<synchronous>, transform_indices = @transform_8, window_bounds = array<i64: 1, 64>}, {pipeline_mode = #tpu.pipeline_mode<synchronous>, transform_indices = @transform_9, window_bounds = array<i64: 64, 32>}, {pipeline_mode = #tpu.pipeline_mode<synchronous>, transform_indices = @transform_10, window_bounds = array<i64: 1, 32>}, {pipeline_mode = #tpu.pipeline_mode<synchronous>, transform_indices = @transform_11, window_bounds = array<i64: 1, 32>}, {pipeline_mode = #tpu.pipeline_mode<synchronous>, transform_indices = @transform_12, window_bounds = array<i64: 1, 32>}, {transform_indices = @transform_13, window_bounds = array<i64: 1, 8, 32>}, {transform_indices = @transform_14, window_bounds = array<i64: 1, 4, 8, 8>}]} {
    %c0_i32 = arith.constant 0 : i32
    %0 = arith.cmpi eq, %arg1, %c0_i32 : i32
    %1 = arith.extui %0 : i1 to i32
    %c0_i32_0 = arith.constant 0 : i32
    %2 = arith.cmpi ne, %1, %c0_i32_0 : i32
    scf.if %2 {
      %c0_62 = arith.constant 0 : index
      %c0_63 = arith.constant 0 : index
      %c0_64 = arith.constant 0 : index
      %135 = vector.load %arg3[%c0_62, %c0_63, %c0_64] : memref<1x8x32xf32, #tpu.memory_space<vmem>>, vector<1x8x32xf32>
      %136 = vector.shape_cast %135 : vector<1x8x32xf32> to vector<8x32xf32>
      %137 = arith.truncf %136 : vector<8x32xf32> to vector<8x32xbf16>
      %c0_65 = arith.constant 0 : index
      %c0_66 = arith.constant 0 : index
      %c0_67 = arith.constant 0 : index
      %138 = vector.load %arg4[%c0_65, %c0_66, %c0_67] : memref<1x8x32xf32, #tpu.memory_space<vmem>>, vector<1x8x32xf32>
      %139 = vector.shape_cast %138 : vector<1x8x32xf32> to vector<8x32xf32>
      %140 = arith.truncf %139 : vector<8x32xf32> to vector<8x32xbf16>
      %c0_68 = arith.constant 0 : index
      %c0_69 = arith.constant 0 : index
      %141 = vector.load %arg7[%c0_68, %c0_69] : memref<32x64xbf16, #tpu.memory_space<vmem>>, vector<32x64xbf16>
      %cst_70 = arith.constant dense<0.000000e+00> : vector<8x64xf32>
      %142 = tpu.matmul %137, %141, %cst_70 {dimension_numbers = #tpu.dot_dimension_numbers<[1], [0], [0], [1], [0, 0, 1, 1], [], []>} : vector<8x32xbf16>, vector<32x64xbf16>, vector<8x64xf32> -> vector<8x64xf32>
      %c0_71 = arith.constant 0 : index
      %c0_72 = arith.constant 0 : index
      %143 = vector.load %arg8[%c0_71, %c0_72] : memref<1x64xf32, #tpu.memory_space<vmem>>, vector<1x64xf32>
      %144 = vector.broadcast %143 : vector<1x64xf32> to vector<8x64xf32>
      %145 = arith.addf %142, %144 : vector<8x64xf32>
      %c0_73 = arith.constant 0 : index
      %c0_74 = arith.constant 0 : index
      %146 = vector.load %arg9[%c0_73, %c0_74] : memref<32x64xbf16, #tpu.memory_space<vmem>>, vector<32x64xbf16>
      %cst_75 = arith.constant dense<0.000000e+00> : vector<8x64xf32>
      %147 = tpu.matmul %140, %146, %cst_75 {dimension_numbers = #tpu.dot_dimension_numbers<[1], [0], [0], [1], [0, 0, 1, 1], [], []>} : vector<8x32xbf16>, vector<32x64xbf16>, vector<8x64xf32> -> vector<8x64xf32>
      %c0_76 = arith.constant 0 : index
      %c0_77 = arith.constant 0 : index
      %148 = vector.load %arg10[%c0_76, %c0_77] : memref<1x64xf32, #tpu.memory_space<vmem>>, vector<1x64xf32>
      %149 = vector.broadcast %148 : vector<1x64xf32> to vector<8x64xf32>
      %150 = arith.addf %147, %149 : vector<8x64xf32>
      %151 = arith.truncf %145 : vector<8x64xf32> to vector<8x64xbf16>
      %c0_78 = arith.constant 0 : index
      %c0_79 = arith.constant 0 : index
      %152 = vector.load %arg17[%c0_78, %c0_79] : memref<8x64xbf16, #tpu.memory_space<vmem>>, vector<8x64xbf16>
      tpu.vector_store %arg17[%c0_78, %c0_79], %151 {strides = array<i32>} : memref<8x64xbf16, #tpu.memory_space<vmem>>, vector<8x64xbf16>,
      %153 = arith.truncf %150 : vector<8x64xf32> to vector<8x64xbf16>
      %c0_80 = arith.constant 0 : index
      %c0_81 = arith.constant 0 : index
      %154 = vector.load %arg18[%c0_80, %c0_81] : memref<8x64xbf16, #tpu.memory_space<vmem>>, vector<8x64xbf16>
      tpu.vector_store %arg18[%c0_80, %c0_81], %153 {strides = array<i32>} : memref<8x64xbf16, #tpu.memory_space<vmem>>, vector<8x64xbf16>,
    } else {
    }
    %c0 = arith.constant 0 : index
    %c0_1 = arith.constant 0 : index
    %c0_2 = arith.constant 0 : index
    %3 = vector.load %arg2[%c0, %c0_1, %c0_2] : memref<1x8x32xf32, #tpu.memory_space<vmem>>, vector<1x8x32xf32>
    %4 = vector.shape_cast %3 : vector<1x8x32xf32> to vector<8x32xf32>
    %5 = arith.truncf %4 : vector<8x32xf32> to vector<8x32xbf16>
    %c0_3 = arith.constant 0 : index
    %c0_4 = arith.constant 0 : index
    %6 = vector.load %arg5[%c0_3, %c0_4] : memref<32x64xbf16, #tpu.memory_space<vmem>>, vector<32x64xbf16>
    %cst = arith.constant dense<0.000000e+00> : vector<8x64xf32>
    %7 = tpu.matmul %5, %6, %cst {dimension_numbers = #tpu.dot_dimension_numbers<[1], [0], [0], [1], [0, 0, 1, 1], [], []>} : vector<8x32xbf16>, vector<32x64xbf16>, vector<8x64xf32> -> vector<8x64xf32>
    %c0_5 = arith.constant 0 : index
    %c0_6 = arith.constant 0 : index
    %8 = vector.load %arg6[%c0_5, %c0_6] : memref<1x64xf32, #tpu.memory_space<vmem>>, vector<1x64xf32>
    %9 = vector.broadcast %8 : vector<1x64xf32> to vector<8x64xf32>
    %10 = arith.addf %7, %9 : vector<8x64xf32>
    %cst_7 = arith.constant 2.500000e-01 : f32
    %11 = vector.broadcast %cst_7 : f32 to vector<8x64xf32>
    %12 = arith.mulf %10, %11 : vector<8x64xf32>
    %13 = arith.truncf %12 : vector<8x64xf32> to vector<8x64xbf16>
    %c0_8 = arith.constant 0 : index
    %c0_9 = arith.constant 0 : index
    %14 = vector.load %arg17[%c0_8, %c0_9] : memref<8x64xbf16, #tpu.memory_space<vmem>>, vector<8x64xbf16>
    %c0_10 = arith.constant 0 : index
    %c0_11 = arith.constant 0 : index
    %15 = vector.load %arg18[%c0_10, %c0_11] : memref<8x64xbf16, #tpu.memory_space<vmem>>, vector<8x64xbf16>
    %c0_12 = arith.constant 0 : index
    %c0_13 = arith.constant 0 : index
    %16 = vector.load %arg11[%c0_12, %c0_13] : memref<64x32xbf16, #tpu.memory_space<vmem>>, vector<64x32xbf16>
    %cst_14 = arith.constant 0.000000e+00 : f32
    %17 = vector.broadcast %cst_14 : f32 to vector<8x32xf32>
    %18 = vector.extract_strided_slice %13 {offsets = [0, 0], sizes = [8, 16], strides = [1, 1]} : vector<8x64xbf16> to vector<8x16xbf16>
    %19 = vector.extract_strided_slice %14 {offsets = [0, 0], sizes = [8, 16], strides = [1, 1]} : vector<8x64xbf16> to vector<8x16xbf16>
    %20 = vector.extract_strided_slice %15 {offsets = [0, 0], sizes = [8, 16], strides = [1, 1]} : vector<8x64xbf16> to vector<8x16xbf16>
    %cst_15 = arith.constant dense<0.000000e+00> : vector<8x8xf32>
    %21 = tpu.matmul %18, %19, %cst_15 {dimension_numbers = #tpu.dot_dimension_numbers<[1], [1], [0], [0], [0, 0, 1, 0], [], []>} : vector<8x16xbf16>, vector<8x16xbf16>, vector<8x8xf32> -> vector<8x8xf32>
    %cst_16 = arith.constant dense<0xFF800000> : vector<8xf32>
    %22 = vector.multi_reduction <maximumf>, %21, %cst_16 [1] : vector<8x8xf32> to vector<8xf32>
    %23 = vector.shape_cast %22 : vector<8xf32> to vector<8x1xf32>
    %24 = vector.broadcast %23 : vector<8x1xf32> to vector<8x8xf32>
    %25 = arith.subf %21, %24 : vector<8x8xf32>
    %26 = math.exp %25 : vector<8x8xf32>
    %cst_17 = arith.constant dense<0.000000e+00> : vector<8xf32>
    %27 = vector.multi_reduction <add>, %26, %cst_17 [1] : vector<8x8xf32> to vector<8xf32>
    %28 = vector.shape_cast %27 : vector<8xf32> to vector<8x1xf32>
    %29 = vector.broadcast %28 : vector<8x1xf32> to vector<8x8xf32>
    %30 = arith.divf %26, %29 : vector<8x8xf32>
    %c0_18 = arith.constant 0 : index
    %c0_19 = arith.constant 0 : index
    %c0_20 = arith.constant 0 : index
    %c0_21 = arith.constant 0 : index
    %31 = vector.load %arg16[%c0_18, %c0_19, %c0_20, %c0_21] : memref<1x4x8x8xf32, #tpu.memory_space<vmem>>, vector<1x1x8x8xf32>
    %32 = vector.shape_cast %31 : vector<1x1x8x8xf32> to vector<8x8xf32>
    %33 = vector.shape_cast %30 : vector<8x8xf32> to vector<1x1x8x8xf32>
    tpu.vector_store %arg16[%c0_18, %c0_19, %c0_20, %c0_21], %33 {strides = array<i32>} : memref<1x4x8x8xf32, #tpu.memory_space<vmem>>, vector<1x1x8x8xf32>,
    %34 = arith.truncf %30 : vector<8x8xf32> to vector<8x8xbf16>
    %cst_22 = arith.constant dense<0.000000e+00> : vector<8x16xf32>
    %35 = tpu.matmul %34, %20, %cst_22 {dimension_numbers = #tpu.dot_dimension_numbers<[1], [0], [0], [1], [0, 0, 1, 1], [], []>} : vector<8x8xbf16>, vector<8x16xbf16>, vector<8x16xf32> -> vector<8x16xf32>
    %36 = arith.truncf %35 : vector<8x16xf32> to vector<8x16xbf16>
    %37 = vector.extract_strided_slice %16 {offsets = [0, 0], sizes = [16, 32], strides = [1, 1]} : vector<64x32xbf16> to vector<16x32xbf16>
    %cst_23 = arith.constant dense<0.000000e+00> : vector<8x32xf32>
    %38 = tpu.matmul %36, %37, %cst_23 {dimension_numbers = #tpu.dot_dimension_numbers<[1], [0], [0], [1], [0, 0, 1, 1], [], []>} : vector<8x16xbf16>, vector<16x32xbf16>, vector<8x32xf32> -> vector<8x32xf32>
    %39 = arith.addf %17, %38 : vector<8x32xf32>
    %40 = vector.extract_strided_slice %13 {offsets = [0, 16], sizes = [8, 16], strides = [1, 1]} : vector<8x64xbf16> to vector<8x16xbf16>
    %41 = vector.extract_strided_slice %14 {offsets = [0, 16], sizes = [8, 16], strides = [1, 1]} : vector<8x64xbf16> to vector<8x16xbf16>
    %42 = vector.extract_strided_slice %15 {offsets = [0, 16], sizes = [8, 16], strides = [1, 1]} : vector<8x64xbf16> to vector<8x16xbf16>
    %cst_24 = arith.constant dense<0.000000e+00> : vector<8x8xf32>
    %43 = tpu.matmul %40, %41, %cst_24 {dimension_numbers = #tpu.dot_dimension_numbers<[1], [1], [0], [0], [0, 0, 1, 0], [], []>} : vector<8x16xbf16>, vector<8x16xbf16>, vector<8x8xf32> -> vector<8x8xf32>
    %cst_25 = arith.constant dense<0xFF800000> : vector<8xf32>
    %44 = vector.multi_reduction <maximumf>, %43, %cst_25 [1] : vector<8x8xf32> to vector<8xf32>
    %45 = vector.shape_cast %44 : vector<8xf32> to vector<8x1xf32>
    %46 = vector.broadcast %45 : vector<8x1xf32> to vector<8x8xf32>
    %47 = arith.subf %43, %46 : vector<8x8xf32>
    %48 = math.exp %47 : vector<8x8xf32>
    %cst_26 = arith.constant dense<0.000000e+00> : vector<8xf32>
    %49 = vector.multi_reduction <add>, %48, %cst_26 [1] : vector<8x8xf32> to vector<8xf32>
    %50 = vector.shape_cast %49 : vector<8xf32> to vector<8x1xf32>
    %51 = vector.broadcast %50 : vector<8x1xf32> to vector<8x8xf32>
    %52 = arith.divf %48, %51 : vector<8x8xf32>
    %c0_27 = arith.constant 0 : index
    %c1 = arith.constant 1 : index
    %c0_28 = arith.constant 0 : index
    %c0_29 = arith.constant 0 : index
    %53 = vector.load %arg16[%c0_27, %c1, %c0_28, %c0_29] : memref<1x4x8x8xf32, #tpu.memory_space<vmem>>, vector<1x1x8x8xf32>
    %54 = vector.shape_cast %53 : vector<1x1x8x8xf32> to vector<8x8xf32>
    %55 = vector.shape_cast %52 : vector<8x8xf32> to vector<1x1x8x8xf32>
    tpu.vector_store %arg16[%c0_27, %c1, %c0_28, %c0_29], %55 {strides = array<i32>} : memref<1x4x8x8xf32, #tpu.memory_space<vmem>>, vector<1x1x8x8xf32>,
    %56 = arith.truncf %52 : vector<8x8xf32> to vector<8x8xbf16>
    %cst_30 = arith.constant dense<0.000000e+00> : vector<8x16xf32>
    %57 = tpu.matmul %56, %42, %cst_30 {dimension_numbers = #tpu.dot_dimension_numbers<[1], [0], [0], [1], [0, 0, 1, 1], [], []>} : vector<8x8xbf16>, vector<8x16xbf16>, vector<8x16xf32> -> vector<8x16xf32>
    %58 = arith.truncf %57 : vector<8x16xf32> to vector<8x16xbf16>
    %59 = vector.extract_strided_slice %16 {offsets = [16, 0], sizes = [16, 32], strides = [1, 1]} : vector<64x32xbf16> to vector<16x32xbf16>
    %cst_31 = arith.constant dense<0.000000e+00> : vector<8x32xf32>
    %60 = tpu.matmul %58, %59, %cst_31 {dimension_numbers = #tpu.dot_dimension_numbers<[1], [0], [0], [1], [0, 0, 1, 1], [], []>} : vector<8x16xbf16>, vector<16x32xbf16>, vector<8x32xf32> -> vector<8x32xf32>
    %61 = arith.addf %39, %60 : vector<8x32xf32>
    %62 = vector.extract_strided_slice %13 {offsets = [0, 32], sizes = [8, 16], strides = [1, 1]} : vector<8x64xbf16> to vector<8x16xbf16>
    %63 = vector.extract_strided_slice %14 {offsets = [0, 32], sizes = [8, 16], strides = [1, 1]} : vector<8x64xbf16> to vector<8x16xbf16>
    %64 = vector.extract_strided_slice %15 {offsets = [0, 32], sizes = [8, 16], strides = [1, 1]} : vector<8x64xbf16> to vector<8x16xbf16>
    %cst_32 = arith.constant dense<0.000000e+00> : vector<8x8xf32>
    %65 = tpu.matmul %62, %63, %cst_32 {dimension_numbers = #tpu.dot_dimension_numbers<[1], [1], [0], [0], [0, 0, 1, 0], [], []>} : vector<8x16xbf16>, vector<8x16xbf16>, vector<8x8xf32> -> vector<8x8xf32>
    %cst_33 = arith.constant dense<0xFF800000> : vector<8xf32>
    %66 = vector.multi_reduction <maximumf>, %65, %cst_33 [1] : vector<8x8xf32> to vector<8xf32>
    %67 = vector.shape_cast %66 : vector<8xf32> to vector<8x1xf32>
    %68 = vector.broadcast %67 : vector<8x1xf32> to vector<8x8xf32>
    %69 = arith.subf %65, %68 : vector<8x8xf32>
    %70 = math.exp %69 : vector<8x8xf32>
    %cst_34 = arith.constant dense<0.000000e+00> : vector<8xf32>
    %71 = vector.multi_reduction <add>, %70, %cst_34 [1] : vector<8x8xf32> to vector<8xf32>
    %72 = vector.shape_cast %71 : vector<8xf32> to vector<8x1xf32>
    %73 = vector.broadcast %72 : vector<8x1xf32> to vector<8x8xf32>
    %74 = arith.divf %70, %73 : vector<8x8xf32>
    %c0_35 = arith.constant 0 : index
    %c2 = arith.constant 2 : index
    %c0_36 = arith.constant 0 : index
    %c0_37 = arith.constant 0 : index
    %75 = vector.load %arg16[%c0_35, %c2, %c0_36, %c0_37] : memref<1x4x8x8xf32, #tpu.memory_space<vmem>>, vector<1x1x8x8xf32>
    %76 = vector.shape_cast %75 : vector<1x1x8x8xf32> to vector<8x8xf32>
    %77 = vector.shape_cast %74 : vector<8x8xf32> to vector<1x1x8x8xf32>
    tpu.vector_store %arg16[%c0_35, %c2, %c0_36, %c0_37], %77 {strides = array<i32>} : memref<1x4x8x8xf32, #tpu.memory_space<vmem>>, vector<1x1x8x8xf32>,
    %78 = arith.truncf %74 : vector<8x8xf32> to vector<8x8xbf16>
    %cst_38 = arith.constant dense<0.000000e+00> : vector<8x16xf32>
    %79 = tpu.matmul %78, %64, %cst_38 {dimension_numbers = #tpu.dot_dimension_numbers<[1], [0], [0], [1], [0, 0, 1, 1], [], []>} : vector<8x8xbf16>, vector<8x16xbf16>, vector<8x16xf32> -> vector<8x16xf32>
    %80 = arith.truncf %79 : vector<8x16xf32> to vector<8x16xbf16>
    %81 = vector.extract_strided_slice %16 {offsets = [32, 0], sizes = [16, 32], strides = [1, 1]} : vector<64x32xbf16> to vector<16x32xbf16>
    %cst_39 = arith.constant dense<0.000000e+00> : vector<8x32xf32>
    %82 = tpu.matmul %80, %81, %cst_39 {dimension_numbers = #tpu.dot_dimension_numbers<[1], [0], [0], [1], [0, 0, 1, 1], [], []>} : vector<8x16xbf16>, vector<16x32xbf16>, vector<8x32xf32> -> vector<8x32xf32>
    %83 = arith.addf %61, %82 : vector<8x32xf32>
    %84 = vector.extract_strided_slice %13 {offsets = [0, 48], sizes = [8, 16], strides = [1, 1]} : vector<8x64xbf16> to vector<8x16xbf16>
    %85 = vector.extract_strided_slice %14 {offsets = [0, 48], sizes = [8, 16], strides = [1, 1]} : vector<8x64xbf16> to vector<8x16xbf16>
    %86 = vector.extract_strided_slice %15 {offsets = [0, 48], sizes = [8, 16], strides = [1, 1]} : vector<8x64xbf16> to vector<8x16xbf16>
    %cst_40 = arith.constant dense<0.000000e+00> : vector<8x8xf32>
    %87 = tpu.matmul %84, %85, %cst_40 {dimension_numbers = #tpu.dot_dimension_numbers<[1], [1], [0], [0], [0, 0, 1, 0], [], []>} : vector<8x16xbf16>, vector<8x16xbf16>, vector<8x8xf32> -> vector<8x8xf32>
    %cst_41 = arith.constant dense<0xFF800000> : vector<8xf32>
    %88 = vector.multi_reduction <maximumf>, %87, %cst_41 [1] : vector<8x8xf32> to vector<8xf32>
    %89 = vector.shape_cast %88 : vector<8xf32> to vector<8x1xf32>
    %90 = vector.broadcast %89 : vector<8x1xf32> to vector<8x8xf32>
    %91 = arith.subf %87, %90 : vector<8x8xf32>
    %92 = math.exp %91 : vector<8x8xf32>
    %cst_42 = arith.constant dense<0.000000e+00> : vector<8xf32>
    %93 = vector.multi_reduction <add>, %92, %cst_42 [1] : vector<8x8xf32> to vector<8xf32>
    %94 = vector.shape_cast %93 : vector<8xf32> to vector<8x1xf32>
    %95 = vector.broadcast %94 : vector<8x1xf32> to vector<8x8xf32>
    %96 = arith.divf %92, %95 : vector<8x8xf32>
    %c0_43 = arith.constant 0 : index
    %c3 = arith.constant 3 : index
    %c0_44 = arith.constant 0 : index
    %c0_45 = arith.constant 0 : index
    %97 = vector.load %arg16[%c0_43, %c3, %c0_44, %c0_45] : memref<1x4x8x8xf32, #tpu.memory_space<vmem>>, vector<1x1x8x8xf32>
    %98 = vector.shape_cast %97 : vector<1x1x8x8xf32> to vector<8x8xf32>
    %99 = vector.shape_cast %96 : vector<8x8xf32> to vector<1x1x8x8xf32>
    tpu.vector_store %arg16[%c0_43, %c3, %c0_44, %c0_45], %99 {strides = array<i32>} : memref<1x4x8x8xf32, #tpu.memory_space<vmem>>, vector<1x1x8x8xf32>,
    %100 = arith.truncf %96 : vector<8x8xf32> to vector<8x8xbf16>
    %cst_46 = arith.constant dense<0.000000e+00> : vector<8x16xf32>
    %101 = tpu.matmul %100, %86, %cst_46 {dimension_numbers = #tpu.dot_dimension_numbers<[1], [0], [0], [1], [0, 0, 1, 1], [], []>} : vector<8x8xbf16>, vector<8x16xbf16>, vector<8x16xf32> -> vector<8x16xf32>
    %102 = arith.truncf %101 : vector<8x16xf32> to vector<8x16xbf16>
    %103 = vector.extract_strided_slice %16 {offsets = [48, 0], sizes = [16, 32], strides = [1, 1]} : vector<64x32xbf16> to vector<16x32xbf16>
    %cst_47 = arith.constant dense<0.000000e+00> : vector<8x32xf32>
    %104 = tpu.matmul %102, %103, %cst_47 {dimension_numbers = #tpu.dot_dimension_numbers<[1], [0], [0], [1], [0, 0, 1, 1], [], []>} : vector<8x16xbf16>, vector<16x32xbf16>, vector<8x32xf32> -> vector<8x32xf32>
    %105 = arith.addf %83, %104 : vector<8x32xf32>
    %c0_48 = arith.constant 0 : index
    %c0_49 = arith.constant 0 : index
    %106 = vector.load %arg12[%c0_48, %c0_49] : memref<1x32xf32, #tpu.memory_space<vmem>>, vector<1x32xf32>
    %107 = vector.broadcast %106 : vector<1x32xf32> to vector<8x32xf32>
    %108 = arith.addf %105, %107 : vector<8x32xf32>
    %109 = arith.addf %4, %108 : vector<8x32xf32>
    %cst_50 = arith.constant dense<0.000000e+00> : vector<8xf32>
    %110 = vector.multi_reduction <add>, %109, %cst_50 [1] : vector<8x32xf32> to vector<8xf32>
    %111 = vector.shape_cast %110 : vector<8xf32> to vector<8x1xf32>
    %cst_51 = arith.constant 3.200000e+01 : f32
    %112 = vector.broadcast %cst_51 : f32 to vector<8x1xf32>
    %113 = arith.divf %111, %112 : vector<8x1xf32>
    %114 = vector.broadcast %113 : vector<8x1xf32> to vector<8x32xf32>
    %115 = arith.subf %109, %114 : vector<8x32xf32>
    %116 = arith.mulf %115, %115 : vector<8x32xf32>
    %cst_52 = arith.constant dense<0.000000e+00> : vector<8xf32>
    %117 = vector.multi_reduction <add>, %116, %cst_52 [1] : vector<8x32xf32> to vector<8xf32>
    %118 = vector.shape_cast %117 : vector<8xf32> to vector<8x1xf32>
    %cst_53 = arith.constant 3.200000e+01 : f32
    %119 = vector.broadcast %cst_53 : f32 to vector<8x1xf32>
    %120 = arith.divf %118, %119 : vector<8x1xf32>
    %cst_54 = arith.constant 9.99999974E-6 : f32
    %121 = vector.broadcast %cst_54 : f32 to vector<8x1xf32>
    %122 = arith.addf %120, %121 : vector<8x1xf32>
    %123 = math.rsqrt %122 : vector<8x1xf32>
    %124 = vector.broadcast %123 : vector<8x1xf32> to vector<8x32xf32>
    %125 = arith.mulf %115, %124 : vector<8x32xf32>
    %c0_55 = arith.constant 0 : index
    %c0_56 = arith.constant 0 : index
    %126 = vector.load %arg13[%c0_55, %c0_56] : memref<1x32xf32, #tpu.memory_space<vmem>>, vector<1x32xf32>
    %127 = vector.broadcast %126 : vector<1x32xf32> to vector<8x32xf32>
    %128 = arith.mulf %125, %127 : vector<8x32xf32>
    %c0_57 = arith.constant 0 : index
    %c0_58 = arith.constant 0 : index
    %129 = vector.load %arg14[%c0_57, %c0_58] : memref<1x32xf32, #tpu.memory_space<vmem>>, vector<1x32xf32>
    %130 = vector.broadcast %129 : vector<1x32xf32> to vector<8x32xf32>
    %131 = arith.addf %128, %130 : vector<8x32xf32>
    %c0_59 = arith.constant 0 : index
    %c0_60 = arith.constant 0 : index
    %c0_61 = arith.constant 0 : index
    %132 = vector.load %arg15[%c0_59, %c0_60, %c0_61] : memref<1x8x32xf32, #tpu.memory_space<vmem>>, vector<1x8x32xf32>
    %133 = vector.shape_cast %132 : vector<1x8x32xf32> to vector<8x32xf32>
    %134 = vector.shape_cast %131 : vector<8x32xf32> to vector<1x8x32xf32>
    tpu.vector_store %arg15[%c0_59, %c0_60, %c0_61], %134 {strides = array<i32>} : memref<1x8x32xf32, #tpu.memory_space<vmem>>, vector<1x8x32xf32>,
    return
  }
  func.func @transform_0(%arg0: i32, %arg1: i32) -> (i32, i32, i32) {
    %c0_i32 = arith.constant 0 : i32
    %c0_i32_0 = arith.constant 0 : i32
    return %arg0, %arg1, %c0_i32 : i32, i32, i32
  }
  func.func @transform_1(%arg0: i32, %arg1: i32) -> (i32, i32, i32) {
    %c0_i32 = arith.constant 0 : i32
    %c0_i32_0 = arith.constant 0 : i32
    %c0_i32_1 = arith.constant 0 : i32
    return %arg0, %c0_i32, %c0_i32_0 : i32, i32, i32
  }
  func.func @transform_2(%arg0: i32, %arg1: i32) -> (i32, i32, i32) {
    %c0_i32 = arith.constant 0 : i32
    %c0_i32_0 = arith.constant 0 : i32
    %c0_i32_1 = arith.constant 0 : i32
    return %arg0, %c0_i32, %c0_i32_0 : i32, i32, i32
  }
  func.func @transform_3(%arg0: i32, %arg1: i32) -> (i32, i32) {
    %c0_i32 = arith.constant 0 : i32
    %c0_i32_0 = arith.constant 0 : i32
    %c0_i32_1 = arith.constant 0 : i32
    return %c0_i32, %c0_i32_0 : i32, i32
  }
  func.func @transform_4(%arg0: i32, %arg1: i32) -> (i32, i32) {
    %c0_i32 = arith.constant 0 : i32
    %c0_i32_0 = arith.constant 0 : i32
    %c0_i32_1 = arith.constant 0 : i32
    return %c0_i32, %c0_i32_0 : i32, i32
  }
  func.func @transform_5(%arg0: i32, %arg1: i32) -> (i32, i32) {
    %c0_i32 = arith.constant 0 : i32
    %c0_i32_0 = arith.constant 0 : i32
    %c0_i32_1 = arith.constant 0 : i32
    return %c0_i32, %c0_i32_0 : i32, i32
  }
  func.func @transform_6(%arg0: i32, %arg1: i32) -> (i32, i32) {
    %c0_i32 = arith.constant 0 : i32
    %c0_i32_0 = arith.constant 0 : i32
    %c0_i32_1 = arith.constant 0 : i32
    return %c0_i32, %c0_i32_0 : i32, i32
  }
  func.func @transform_7(%arg0: i32, %arg1: i32) -> (i32, i32) {
    %c0_i32 = arith.constant 0 : i32
    %c0_i32_0 = arith.constant 0 : i32
    %c0_i32_1 = arith.constant 0 : i32
    return %c0_i32, %c0_i32_0 : i32, i32
  }
  func.func @transform_8(%arg0: i32, %arg1: i32) -> (i32, i32) {
    %c0_i32 = arith.constant 0 : i32
    %c0_i32_0 = arith.constant 0 : i32
    %c0_i32_1 = arith.constant 0 : i32
    return %c0_i32, %c0_i32_0 : i32, i32
  }
  func.func @transform_9(%arg0: i32, %arg1: i32) -> (i32, i32) {
    %c0_i32 = arith.constant 0 : i32
    %c0_i32_0 = arith.constant 0 : i32
    %c0_i32_1 = arith.constant 0 : i32
    return %c0_i32, %c0_i32_0 : i32, i32
  }
  func.func @transform_10(%arg0: i32, %arg1: i32) -> (i32, i32) {
    %c0_i32 = arith.constant 0 : i32
    %c0_i32_0 = arith.constant 0 : i32
    %c0_i32_1 = arith.constant 0 : i32
    return %c0_i32, %c0_i32_0 : i32, i32
  }
  func.func @transform_11(%arg0: i32, %arg1: i32) -> (i32, i32) {
    %c0_i32 = arith.constant 0 : i32
    %c0_i32_0 = arith.constant 0 : i32
    %c0_i32_1 = arith.constant 0 : i32
    return %c0_i32, %c0_i32_0 : i32, i32
  }
  func.func @transform_12(%arg0: i32, %arg1: i32) -> (i32, i32) {
    %c0_i32 = arith.constant 0 : i32
    %c0_i32_0 = arith.constant 0 : i32
    %c0_i32_1 = arith.constant 0 : i32
    return %c0_i32, %c0_i32_0 : i32, i32
  }
  func.func @transform_13(%arg0: i32, %arg1: i32) -> (i32, i32, i32) {
    %c0_i32 = arith.constant 0 : i32
    %c0_i32_0 = arith.constant 0 : i32
    return %arg0, %arg1, %c0_i32 : i32, i32, i32
  }
  func.func @transform_14(%arg0: i32, %arg1: i32) -> (i32, i32, i32, i32) {
    %c0_i32 = arith.constant 0 : i32
    %c0_i32_0 = arith.constant 0 : i32
    %c0_i32_1 = arith.constant 0 : i32
    return %arg0, %c0_i32, %arg1, %c0_i32_0 : i32, i32, i32, i32
  }
}

</mosaic_0001>

<llo_original>
// kernel: tpu_custom_call.1
$region0: #{tpu_custom_call.1}
  #allocation0 [shape = 'u32[]', space=smem, size = 0x4, offset = 0x4, fixed_abs, tag = 'smem constant byte address 0x4 - core index']
  #allocation1 [shape = 'u32[144,128]{1,0:T(1,128)}', space=vmem, size = 0x12000, scoped, tag = 'internal scratch']
  #allocation2 [shape = 'bf16[8,64]{1,0:T(8,128)(2,1)}', space=vmem, size = 0x800, scoped, tag = 'scratch operand']
  #allocation3 [shape = 'bf16[8,64]{1,0:T(8,128)(2,1)}', space=vmem, size = 0x800, scoped, tag = 'scratch operand']
  %s0 = inlined_call_operand.vmem [shape: f32[2,8,32], index: 0, kind: input, shape index: {}]
  %s1 = inlined_call_operand.vmem [shape: f32[2,8,32], index: 1, kind: input, shape index: {}]
  %s2 = inlined_call_operand.vmem [shape: f32[2,8,32], index: 2, kind: input, shape index: {}]
  %s3 = inlined_call_operand.hbm [shape: bf16[32,64], index: 3, kind: input, shape index: {}]
  %s4 = inlined_call_operand.vmem [shape: f32[1,64], index: 4, kind: input, shape index: {}]
  %s5 = inlined_call_operand.hbm [shape: bf16[32,64], index: 5, kind: input, shape index: {}]
  %s6 = inlined_call_operand.vmem [shape: f32[1,64], index: 6, kind: input, shape index: {}]
  %s7 = inlined_call_operand.hbm [shape: bf16[32,64], index: 7, kind: input, shape index: {}]
  %s8 = inlined_call_operand.vmem [shape: f32[1,64], index: 8, kind: input, shape index: {}]
  %s9 = inlined_call_operand.vmem [shape: bf16[64,32], index: 9, kind: input, shape index: {}]
  %s10 = inlined_call_operand.vmem [shape: f32[1,32], index: 10, kind: input, shape index: {}]
  %s11 = inlined_call_operand.vmem [shape: f32[1,32], index: 11, kind: input, shape index: {}]
  %s12 = inlined_call_operand.vmem [shape: f32[1,32], index: 12, kind: input, shape index: {}]
  %s13 = inlined_call_operand.hbm [shape: f32[2,8,32], index: 13, kind: output, shape index: {0}]
  %s14 = inlined_call_operand.hbm [shape: f32[2,4,8,8], index: 14, kind: output, shape index: {1}]
  %15 = xla_tuple %s13, %s14
  %s16 = sld [smem:[#allocation0]]
  $region109: #{tpu_custom_call.1} parent=0
    _
  %s18 = ssub.s32 1, %s16
  %s19 = scalar_select 0, %s18, %s16
  $region1: #{tpu_custom_call.1} parent=0
    #allocation4 [shape = 'u8[8192]{0}', space=vmem, size = 0x2000, scoped, tag = 'input window, operand 3, single buffered']
    #allocation5 [shape = 's32[2]{0}', space=sflag, size = 0x8, scoped, tag = 'scoped memory for tpu_custom_call.1']
    #allocation6 [shape = 's32[2]{0}', space=sflag, size = 0x8, scoped, tag = 'scoped memory for tpu_custom_call.1']
    #allocation7 [shape = 'u8[8192]{0}', space=vmem, size = 0x2000, scoped, tag = 'input window, operand 5, single buffered']
    #allocation8 [shape = 's32[1]{0}', space=sflag, size = 0x4, scoped, tag = 'scoped memory for tpu_custom_call.1']
    #allocation9 [shape = 'u8[8192]{0}', space=vmem, size = 0x2000, scoped, tag = 'input window, operand 7, single buffered']
    #allocation10 [shape = 'u8[8192]{0}', space=vmem, size = 0x2000, scoped, tag = 'output window, operand 0']
    #allocation11 [shape = 'u8[32768]{0}', space=vmem, size = 0x8000, scoped, tag = 'output window, operand 1']
    #allocation12 [shape = 's32[2]{0}', space=sflag, size = 0x8, scoped, tag = 'scoped memory for tpu_custom_call.1']
    %20 = vsyncpa [#allocation5], 0
    %21 = vsyncpa [#allocation8], 0
    %22 = vsyncpa [#allocation6], 0
    %s23 = scalar_lea.sflag [#allocation6], 1
    %24 = vsyncpa %s23, 0
    %25 = vsyncpa [#allocation12], 0
    %s26 = scalar_lea.sflag [#allocation12], 1
    %27 = vsyncpa %s26, 0
    loop: start=0, step=1, limit=4
    $region2: #{tpu_custom_call.1} parent=1 // loop_pre_header
      _
    $region3: #{tpu_custom_call.1} parent=1 // loop_header
      %s29 = sphi 0, %s33
      %p30 = scmp.ge.s32.totalorder %s29, 4
      %s36 = sphi 0, %s48
      %s37 = sphi 0, %s44
      %s38 = sphi 0, %s36
      %s39 = sphi 0, %s37
      %s40 = sphi 0, %s38
      %s41 = sphi 0, %s39
      %s53 = sphi 0, %s55
      %s56 = sphi 0, %s53
      %s57 = sphi 0, %s56
      %s73 = sphi 0, %s57
      %s79 = sphi 0, %s81
      %s82 = sphi 0, %s79
      %s83 = sphi 0, %s82
      %s99 = sphi 0, %s83
      %s105 = sphi 0, %s107
      %s108 = sphi 0, %s105
      %s109 = sphi 0, %s108
      %s125 = sphi 0, %s109
      %s129 = sphi 0, %s129
      %s131 = sphi 0, %s129
      %s132 = sphi 0, %s131
      %s146 = sphi 0, %s132
      %s150 = sphi 0, %s150
      %s152 = sphi 0, %s150
      %s153 = sphi 0, %s152
      %s167 = sphi 0, %s153
      %s171 = sphi 0, %s171
      %s173 = sphi 0, %s171
      %s174 = sphi 0, %s173
      %s188 = sphi 0, %s174
      %s192 = sphi 0, %s192
      %s194 = sphi 0, %s192
      %s195 = sphi 0, %s194
      %s209 = sphi 0, %s195
      %s213 = sphi 0, %s213
      %s215 = sphi 0, %s213
      %s216 = sphi 0, %s215
      %s230 = sphi 0, %s216
      %s234 = sphi 0, %s234
      %s236 = sphi 0, %s234
      %s237 = sphi 0, %s236
      %s251 = sphi 0, %s237
      %s255 = sphi 0, %s255
      %s257 = sphi 0, %s255
      %s258 = sphi 0, %s257
      %s272 = sphi 0, %s258
      %s276 = sphi 0, %s276
      %s278 = sphi 0, %s276
      %s279 = sphi 0, %s278
      %s293 = sphi 0, %s279
      %s297 = sphi 0, %s297
      %s299 = sphi 0, %s297
      %s300 = sphi 0, %s299
      %s314 = sphi 0, %s300
      %s318 = sphi 0, %s318
      %s320 = sphi 0, %s318
      %s321 = sphi 0, %s320
      %s335 = sphi 0, %s321
      %s343 = sphi 0, %s345
      %s346 = sphi 0, %s343
      %s347 = sphi 0, %s346
      %s363 = sphi 0, %s347
      %s371 = sphi 0, %s373
      %s374 = sphi 0, %s371
      %s375 = sphi 0, %s374
      %s391 = sphi 0, %s375
    $region4: #{tpu_custom_call.1} parent=1 // loop_header_branch
      %32 = sbr.rel (%p30) target = $region8
    $region5: #{tpu_custom_call.1} parent=1 // loop_body
      %s34 = ssub.s32 %s29, 1
      %s35 = ssub.s32 %s29, 2
      %s42 = sadd.s32 1, %s37
      %p43 = scmp.ge.s32.totalorder %s42, 1
      %s44 = scalar_select %p43, 0, %s42
      %s45 = sadd.s32 1, %s36
      %s46 = scalar_select %p43, %s45, %s36
      %p47 = scmp.ge.s32.totalorder %s46, 2
      %s48 = scalar_select %p47, 0, %s46
      %s49 = ssub.s32 %s36, %s48
      %s50 = ssub.s32 %s37, %s44
      %s51 = sor.u32 %s49, %s50
      %p52 = scmp.eq.s32.totalorder %s51, 0
      %s54 = sadd.s32 %s53, 1
      %s55 = scalar_select %p52, %s53, %s54
      %p58 = pneg %p52
      %p59 = scmp.eq.s32.totalorder %s29, 1
      %p60 = por %p58, %p59
      %p61 = scmp.ne.s32.totalorder %s53, %s56
      %p62 = scmp.eq.s32.totalorder %s29, 0
      %p63 = por %p61, %p62
      %p64 = scmp.ne.s32.totalorder %s53, %s56
      %p65 = scmp.eq.s32.totalorder %s34, 1
      %p66 = por %p64, %p65
      %p67 = scmp.ne.s32.totalorder %s56, %s57
      %p68 = scmp.eq.s32.totalorder %s34, 0
      %p69 = por %p67, %p68
      %p70 = scmp.ne.s32.totalorder %s56, %s57
      %p71 = scmp.eq.s32.totalorder %s35, 1
      %p72 = por %p70, %p71
      %p74 = scmp.ne.s32.totalorder %s57, %s73
      %p75 = scmp.eq.s32.totalorder %s35, 0
      %p76 = por %p74, %p75
      %s77 = ssub.s32 %s36, %s48
      %p78 = scmp.eq.s32.totalorder %s77, 0
      %s80 = sadd.s32 %s79, 1
      %s81 = scalar_select %p78, %s79, %s80
      %p84 = pneg %p78
      %p85 = scmp.eq.s32.totalorder %s29, 1
      %p86 = por %p84, %p85
      %p87 = scmp.ne.s32.totalorder %s79, %s82
      %p88 = scmp.eq.s32.totalorder %s29, 0
      %p89 = por %p87, %p88
      %p90 = scmp.ne.s32.totalorder %s79, %s82
      %p91 = scmp.eq.s32.totalorder %s34, 1
      %p92 = por %p90, %p91
      %p93 = scmp.ne.s32.totalorder %s82, %s83
      %p94 = scmp.eq.s32.totalorder %s34, 0
      %p95 = por %p93, %p94
      %p96 = scmp.ne.s32.totalorder %s82, %s83
      %p97 = scmp.eq.s32.totalorder %s35, 1
      %p98 = por %p96, %p97
      %p100 = scmp.ne.s32.totalorder %s83, %s99
      %p101 = scmp.eq.s32.totalorder %s35, 0
      %p102 = por %p100, %p101
      %s103 = ssub.s32 %s36, %s48
      %p104 = scmp.eq.s32.totalorder %s103, 0
      %s106 = sadd.s32 %s105, 1
      %s107 = scalar_select %p104, %s105, %s106
      %p110 = pneg %p104
      %p111 = scmp.eq.s32.totalorder %s29, 1
      %p112 = por %p110, %p111
      %p113 = scmp.ne.s32.totalorder %s105, %s108
      %p114 = scmp.eq.s32.totalorder %s29, 0
      %p115 = por %p113, %p114
      %p116 = scmp.ne.s32.totalorder %s105, %s108
      %p117 = scmp.eq.s32.totalorder %s34, 1
      %p118 = por %p116, %p117
      %p119 = scmp.ne.s32.totalorder %s108, %s109
      %p120 = scmp.eq.s32.totalorder %s34, 0
      %p121 = por %p119, %p120
      %p122 = scmp.ne.s32.totalorder %s108, %s109
      %p123 = scmp.eq.s32.totalorder %s35, 1
      %p124 = por %p122, %p123
      %p126 = scmp.ne.s32.totalorder %s109, %s125
      %p127 = scmp.eq.s32.totalorder %s35, 0
      %p128 = por %p126, %p127
      %s130 = sadd.s32 %s129, 1
      %p133 = scmp.eq.s32.totalorder %s29, 1
      %p134 = scmp.ne.s32.totalorder %s129, %s131
      %p135 = scmp.eq.s32.totalorder %s29, 0
      %p136 = por %p134, %p135
      %p137 = scmp.ne.s32.totalorder %s129, %s131
      %p138 = scmp.eq.s32.totalorder %s34, 1
      %p139 = por %p137, %p138
      %p140 = scmp.ne.s32.totalorder %s131, %s132
      %p141 = scmp.eq.s32.totalorder %s34, 0
      %p142 = por %p140, %p141
      %p143 = scmp.ne.s32.totalorder %s131, %s132
      %p144 = scmp.eq.s32.totalorder %s35, 1
      %p145 = por %p143, %p144
      %p147 = scmp.ne.s32.totalorder %s132, %s146
      %p148 = scmp.eq.s32.totalorder %s35, 0
      %p149 = por %p147, %p148
      %s151 = sadd.s32 %s150, 1
      %p154 = scmp.eq.s32.totalorder %s29, 1
      %p155 = scmp.ne.s32.totalorder %s150, %s152
      %p156 = scmp.eq.s32.totalorder %s29, 0
      %p157 = por %p155, %p156
      %p158 = scmp.ne.s32.totalorder %s150, %s152
      %p159 = scmp.eq.s32.totalorder %s34, 1
      %p160 = por %p158, %p159
      %p161 = scmp.ne.s32.totalorder %s152, %s153
      %p162 = scmp.eq.s32.totalorder %s34, 0
      %p163 = por %p161, %p162
      %p164 = scmp.ne.s32.totalorder %s152, %s153
      %p165 = scmp.eq.s32.totalorder %s35, 1
      %p166 = por %p164, %p165
      %p168 = scmp.ne.s32.totalorder %s153, %s167
      %p169 = scmp.eq.s32.totalorder %s35, 0
      %p170 = por %p168, %p169
      %s172 = sadd.s32 %s171, 1
      %p175 = scmp.eq.s32.totalorder %s29, 1
      %p176 = scmp.ne.s32.totalorder %s171, %s173
      %p177 = scmp.eq.s32.totalorder %s29, 0
      %p178 = por %p176, %p177
      %p179 = scmp.ne.s32.totalorder %s171, %s173
      %p180 = scmp.eq.s32.totalorder %s34, 1
      %p181 = por %p179, %p180
      %p182 = scmp.ne.s32.totalorder %s173, %s174
      %p183 = scmp.eq.s32.totalorder %s34, 0
      %p184 = por %p182, %p183
      %p185 = scmp.ne.s32.totalorder %s173, %s174
      %p186 = scmp.eq.s32.totalorder %s35, 1
      %p187 = por %p185, %p186
      %p189 = scmp.ne.s32.totalorder %s174, %s188
      %p190 = scmp.eq.s32.totalorder %s35, 0
      %p191 = por %p189, %p190
      %s193 = sadd.s32 %s192, 1
      %p196 = scmp.eq.s32.totalorder %s29, 1
      %p197 = scmp.ne.s32.totalorder %s192, %s194
      %p198 = scmp.eq.s32.totalorder %s29, 0
      %p199 = por %p197, %p198
      %p200 = scmp.ne.s32.totalorder %s192, %s194
      %p201 = scmp.eq.s32.totalorder %s34, 1
      %p202 = por %p200, %p201
      %p203 = scmp.ne.s32.totalorder %s194, %s195
      %p204 = scmp.eq.s32.totalorder %s34, 0
      %p205 = por %p203, %p204
      %p206 = scmp.ne.s32.totalorder %s194, %s195
      %p207 = scmp.eq.s32.totalorder %s35, 1
      %p208 = por %p206, %p207
      %p210 = scmp.ne.s32.totalorder %s195, %s209
      %p211 = scmp.eq.s32.totalorder %s35, 0
      %p212 = por %p210, %p211
      %s214 = sadd.s32 %s213, 1
      %p217 = scmp.eq.s32.totalorder %s29, 1
      %p218 = scmp.ne.s32.totalorder %s213, %s215
      %p219 = scmp.eq.s32.totalorder %s29, 0
      %p220 = por %p218, %p219
      %p221 = scmp.ne.s32.totalorder %s213, %s215
      %p222 = scmp.eq.s32.totalorder %s34, 1
      %p223 = por %p221, %p222
      %p224 = scmp.ne.s32.totalorder %s215, %s216
      %p225 = scmp.eq.s32.totalorder %s34, 0
      %p226 = por %p224, %p225
      %p227 = scmp.ne.s32.totalorder %s215, %s216
      %p228 = scmp.eq.s32.totalorder %s35, 1
      %p229 = por %p227, %p228
      %p231 = scmp.ne.s32.totalorder %s216, %s230
      %p232 = scmp.eq.s32.totalorder %s35, 0
      %p233 = por %p231, %p232
      %s235 = sadd.s32 %s234, 1
      %p238 = scmp.eq.s32.totalorder %s29, 1
      %p239 = scmp.ne.s32.totalorder %s234, %s236
      %p240 = scmp.eq.s32.totalorder %s29, 0
      %p241 = por %p239, %p240
      %p242 = scmp.ne.s32.totalorder %s234, %s236
      %p243 = scmp.eq.s32.totalorder %s34, 1
      %p244 = por %p242, %p243
      %p245 = scmp.ne.s32.totalorder %s236, %s237
      %p246 = scmp.eq.s32.totalorder %s34, 0
      %p247 = por %p245, %p246
      %p248 = scmp.ne.s32.totalorder %s236, %s237
      %p249 = scmp.eq.s32.totalorder %s35, 1
      %p250 = por %p248, %p249
      %p252 = scmp.ne.s32.totalorder %s237, %s251
      %p253 = scmp.eq.s32.totalorder %s35, 0
      %p254 = por %p252, %p253
      %s256 = sadd.s32 %s255, 1
      %p259 = scmp.eq.s32.totalorder %s29, 1
      %p260 = scmp.ne.s32.totalorder %s255, %s257
      %p261 = scmp.eq.s32.totalorder %s29, 0
      %p262 = por %p260, %p261
      %p263 = scmp.ne.s32.totalorder %s255, %s257
      %p264 = scmp.eq.s32.totalorder %s34, 1
      %p265 = por %p263, %p264
      %p266 = scmp.ne.s32.totalorder %s257, %s258
      %p267 = scmp.eq.s32.totalorder %s34, 0
      %p268 = por %p266, %p267
      %p269 = scmp.ne.s32.totalorder %s257, %s258
      %p270 = scmp.eq.s32.totalorder %s35, 1
      %p271 = por %p269, %p270
      %p273 = scmp.ne.s32.totalorder %s258, %s272
      %p274 = scmp.eq.s32.totalorder %s35, 0
      %p275 = por %p273, %p274
      %s277 = sadd.s32 %s276, 1
      %p280 = scmp.eq.s32.totalorder %s29, 1
      %p281 = scmp.ne.s32.totalorder %s276, %s278
      %p282 = scmp.eq.s32.totalorder %s29, 0
      %p283 = por %p281, %p282
      %p284 = scmp.ne.s32.totalorder %s276, %s278
      %p285 = scmp.eq.s32.totalorder %s34, 1
      %p286 = por %p284, %p285
      %p287 = scmp.ne.s32.totalorder %s278, %s279
      %p288 = scmp.eq.s32.totalorder %s34, 0
      %p289 = por %p287, %p288
      %p290 = scmp.ne.s32.totalorder %s278, %s279
      %p291 = scmp.eq.s32.totalorder %s35, 1
      %p292 = por %p290, %p291
      %p294 = scmp.ne.s32.totalorder %s279, %s293
      %p295 = scmp.eq.s32.totalorder %s35, 0
      %p296 = por %p294, %p295
      %s298 = sadd.s32 %s297, 1
      %p301 = scmp.eq.s32.totalorder %s29, 1
      %p302 = scmp.ne.s32.totalorder %s297, %s299
      %p303 = scmp.eq.s32.totalorder %s29, 0
      %p304 = por %p302, %p303
      %p305 = scmp.ne.s32.totalorder %s297, %s299
      %p306 = scmp.eq.s32.totalorder %s34, 1
      %p307 = por %p305, %p306
      %p308 = scmp.ne.s32.totalorder %s299, %s300
      %p309 = scmp.eq.s32.totalorder %s34, 0
      %p310 = por %p308, %p309
      %p311 = scmp.ne.s32.totalorder %s299, %s300
      %p312 = scmp.eq.s32.totalorder %s35, 1
      %p313 = por %p311, %p312
      %p315 = scmp.ne.s32.totalorder %s300, %s314
      %p316 = scmp.eq.s32.totalorder %s35, 0
      %p317 = por %p315, %p316
      %s319 = sadd.s32 %s318, 1
      %p322 = scmp.eq.s32.totalorder %s29, 1
      %p323 = scmp.ne.s32.totalorder %s318, %s320
      %p324 = scmp.eq.s32.totalorder %s29, 0
      %p325 = por %p323, %p324
      %p326 = scmp.ne.s32.totalorder %s318, %s320
      %p327 = scmp.eq.s32.totalorder %s34, 1
      %p328 = por %p326, %p327
      %p329 = scmp.ne.s32.totalorder %s320, %s321
      %p330 = scmp.eq.s32.totalorder %s34, 0
      %p331 = por %p329, %p330
      %p332 = scmp.ne.s32.totalorder %s320, %s321
      %p333 = scmp.eq.s32.totalorder %s35, 1
      %p334 = por %p332, %p333
      %p336 = scmp.ne.s32.totalorder %s321, %s335
      %p337 = scmp.eq.s32.totalorder %s35, 0
      %p338 = por %p336, %p337
      %s339 = ssub.s32 %s36, %s48
      %s340 = ssub.s32 %s37, %s44
      %s341 = sor.u32 %s339, %s340
      %p342 = scmp.eq.s32.totalorder %s341, 0
      %s344 = sadd.s32 %s343, 1
      %s345 = scalar_select %p342, %s343, %s344
      %p348 = pneg %p342
      %p349 = scmp.eq.s32.totalorder %s29, 1
      %p350 = por %p348, %p349
      %p351 = scmp.ne.s32.totalorder %s343, %s346
      %p352 = scmp.eq.s32.totalorder %s29, 0
      %p353 = por %p351, %p352
      %p354 = scmp.ne.s32.totalorder %s343, %s346
      %p355 = scmp.eq.s32.totalorder %s34, 1
      %p356 = por %p354, %p355
      %p357 = scmp.ne.s32.totalorder %s346, %s347
      %p358 = scmp.eq.s32.totalorder %s34, 0
      %p359 = por %p357, %p358
      %p360 = scmp.ne.s32.totalorder %s346, %s347
      %p361 = scmp.eq.s32.totalorder %s35, 1
      %p362 = por %p360, %p361
      %p364 = scmp.ne.s32.totalorder %s347, %s363
      %p365 = scmp.eq.s32.totalorder %s35, 0
      %p366 = por %p364, %p365
      %s367 = ssub.s32 %s36, %s48
      %s368 = ssub.s32 %s37, %s44
      %s369 = sor.u32 %s367, %s368
      %p370 = scmp.eq.s32.totalorder %s369, 0
      %s372 = sadd.s32 %s371, 1
      %s373 = scalar_select %p370, %s371, %s372
      %p376 = pneg %p370
      %p377 = scmp.eq.s32.totalorder %s29, 1
      %p378 = por %p376, %p377
      %p379 = scmp.ne.s32.totalorder %s371, %s374
      %p380 = scmp.eq.s32.totalorder %s29, 0
      %p381 = por %p379, %p380
      %p382 = scmp.ne.s32.totalorder %s371, %s374
      %p383 = scmp.eq.s32.totalorder %s34, 1
      %p384 = por %p382, %p383
      %p385 = scmp.ne.s32.totalorder %s374, %s375
      %p386 = scmp.eq.s32.totalorder %s34, 0
      %p387 = por %p385, %p386
      %p388 = scmp.ne.s32.totalorder %s374, %s375
      %p389 = scmp.eq.s32.totalorder %s35, 1
      %p390 = por %p388, %p389
      %p392 = scmp.ne.s32.totalorder %s375, %s391
      %p393 = scmp.eq.s32.totalorder %s35, 0
      %p394 = por %p392, %p393
      %p395 = scmp.le.s32.totalorder 1, %s29
      %p396 = scmp.lt.s32.totalorder %s29, 3
      %p397 = pnand %p395, %p396
      %p398 = pneg %p397
      // Predicated region
      $region9: #{tpu_custom_call.1} parent=5 // pred_check
        _
      $region10: #{tpu_custom_call.1} parent=5 // pred_check_branch
        %400 = sbr.rel (%p397) target = $region12
      $region11: #{tpu_custom_call.1} parent=5 // pred_region
        %s401 = ssub.s32 %s29, 1
        // Predicated region
        $region13: #{tpu_custom_call.1} parent=11 // pred_check
          %p402 = pneg %p142
        $region14: #{tpu_custom_call.1} parent=11 // pred_check_branch
          %404 = sbr.rel (%p402) target = $region16
        $region15: #{tpu_custom_call.1} parent=11 // pred_region
          %s406 = ssub.s32 256, 256
          %407 = vsyncadd [#allocation5], %s406
          %s408 = sshll.u32 [#allocation4], 4
          %s409 = int_to_ptr.vmem [resolvable:$true] %s408
          %414 = dma.hbm_to_vmem [thread:$0]  %s3, 256, %s409, [#allocation5], 64, 64, 4
        $region16: #{tpu_custom_call.1} parent=11 // pred_fallthru
          _
        // Predicated region
        $region17: #{tpu_custom_call.1} parent=11 // pred_check
          %p415 = pneg %p163
        $region18: #{tpu_custom_call.1} parent=11 // pred_check_branch
          %417 = sbr.rel (%p415) target = $region20
        $region19: #{tpu_custom_call.1} parent=11 // pred_region
          _
        $region20: #{tpu_custom_call.1} parent=11 // pred_fallthru
          _
        // Predicated region
        $region21: #{tpu_custom_call.1} parent=11 // pred_check
          %p418 = pneg %p184
        $region22: #{tpu_custom_call.1} parent=11 // pred_check_branch
          %420 = sbr.rel (%p418) target = $region24
        $region23: #{tpu_custom_call.1} parent=11 // pred_region
          %s422 = ssub.s32 256, 256
          %423 = vsyncadd [#allocation8], %s422
          %s424 = sshll.u32 [#allocation7], 4
          %s425 = int_to_ptr.vmem [resolvable:$true] %s424
          %430 = dma.hbm_to_vmem [thread:$0]  %s5, 256, %s425, [#allocation8], 64, 64, 4
        $region24: #{tpu_custom_call.1} parent=11 // pred_fallthru
          _
        // Predicated region
        $region25: #{tpu_custom_call.1} parent=11 // pred_check
          %p431 = pneg %p205
        $region26: #{tpu_custom_call.1} parent=11 // pred_check_branch
          %433 = sbr.rel (%p431) target = $region28
        $region27: #{tpu_custom_call.1} parent=11 // pred_region
          _
        $region28: #{tpu_custom_call.1} parent=11 // pred_fallthru
          _
        // Predicated region
        $region29: #{tpu_custom_call.1} parent=11 // pred_check
          %p434 = pneg %p226
        $region30: #{tpu_custom_call.1} parent=11 // pred_check_branch
          %436 = sbr.rel (%p434) target = $region32
        $region31: #{tpu_custom_call.1} parent=11 // pred_region
          %s438 = ssub.s32 256, 256
          %439 = vsyncadd [#allocation8], %s438
          %s440 = sshll.u32 [#allocation9], 4
          %s441 = int_to_ptr.vmem [resolvable:$true] %s440
          %446 = dma.hbm_to_vmem [thread:$0]  %s7, 256, %s441, [#allocation8], 64, 64, 4
        $region32: #{tpu_custom_call.1} parent=11 // pred_fallthru
          _
        // Predicated region
        $region33: #{tpu_custom_call.1} parent=11 // pred_check
          %p447 = pneg %p247
        $region34: #{tpu_custom_call.1} parent=11 // pred_check_branch
          %449 = sbr.rel (%p447) target = $region36
        $region35: #{tpu_custom_call.1} parent=11 // pred_region
          _
        $region36: #{tpu_custom_call.1} parent=11 // pred_fallthru
          _
        // Predicated region
        $region37: #{tpu_custom_call.1} parent=11 // pred_check
          %p450 = pneg %p268
        $region38: #{tpu_custom_call.1} parent=11 // pred_check_branch
          %452 = sbr.rel (%p450) target = $region40
        $region39: #{tpu_custom_call.1} parent=11 // pred_region
          _
        $region40: #{tpu_custom_call.1} parent=11 // pred_fallthru
          _
        // Predicated region
        $region41: #{tpu_custom_call.1} parent=11 // pred_check
          %p453 = pneg %p289
        $region42: #{tpu_custom_call.1} parent=11 // pred_check_branch
          %455 = sbr.rel (%p453) target = $region44
        $region43: #{tpu_custom_call.1} parent=11 // pred_region
          _
        $region44: #{tpu_custom_call.1} parent=11 // pred_fallthru
          _
        // Predicated region
        $region45: #{tpu_custom_call.1} parent=11 // pred_check
          %p456 = pneg %p310
        $region46: #{tpu_custom_call.1} parent=11 // pred_check_branch
          %458 = sbr.rel (%p456) target = $region48
        $region47: #{tpu_custom_call.1} parent=11 // pred_region
          _
        $region48: #{tpu_custom_call.1} parent=11 // pred_fallthru
          _
        // Predicated region
        $region49: #{tpu_custom_call.1} parent=11 // pred_check
          %p459 = pneg %p331
        $region50: #{tpu_custom_call.1} parent=11 // pred_check_branch
          %461 = sbr.rel (%p459) target = $region52
        $region51: #{tpu_custom_call.1} parent=11 // pred_region
          _
        $region52: #{tpu_custom_call.1} parent=11 // pred_fallthru
          _
      $region12: #{tpu_custom_call.1} parent=5 // pred_fallthru
        _
      %p462 = scmp.lt.s32.totalorder %s29, 2
      // Predicated region
      $region53: #{tpu_custom_call.1} parent=5 // pred_check
        %p463 = pneg %p462
      $region54: #{tpu_custom_call.1} parent=5 // pred_check_branch
        %465 = sbr.rel (%p463) target = $region56
      $region55: #{tpu_custom_call.1} parent=5 // pred_region
        // Predicated region
        $region57: #{tpu_custom_call.1} parent=55 // pred_check
          %p466 = pneg %p63
        $region58: #{tpu_custom_call.1} parent=55 // pred_check_branch
          %468 = sbr.rel (%p466) target = $region60
        $region59: #{tpu_custom_call.1} parent=55 // pred_region
          %p469 = scmp.lt.s32.totalorder %s36, 1
          %s470 = scalar_select %p469, %s36, 1
          %p471 = scmp.lt.s32.totalorder %s37, 0
          %s472 = scalar_select %p471, %s37, 0
          %s473 = sadd.s32 %s472, %s470
          %s474 = smul.addr %s473, 8
          %s475 = scalar_lea.vmem %s0, %s474
        $region60: #{tpu_custom_call.1} parent=55 // pred_fallthru
          _
        // Predicated region
        $region61: #{tpu_custom_call.1} parent=55 // pred_check
          %p476 = pneg %p89
        $region62: #{tpu_custom_call.1} parent=55 // pred_check_branch
          %478 = sbr.rel (%p476) target = $region64
        $region63: #{tpu_custom_call.1} parent=55 // pred_region
          %p479 = scmp.lt.s32.totalorder %s36, 1
          %s480 = scalar_select %p479, %s36, 1
          %s481 = smul.addr %s480, 8
          %s482 = scalar_lea.vmem %s1, %s481
        $region64: #{tpu_custom_call.1} parent=55 // pred_fallthru
          _
        // Predicated region
        $region65: #{tpu_custom_call.1} parent=55 // pred_check
          %p483 = pneg %p115
        $region66: #{tpu_custom_call.1} parent=55 // pred_check_branch
          %485 = sbr.rel (%p483) target = $region68
        $region67: #{tpu_custom_call.1} parent=55 // pred_region
          %p486 = scmp.lt.s32.totalorder %s36, 1
          %s487 = scalar_select %p486, %s36, 1
          %s488 = smul.addr %s487, 8
          %s489 = scalar_lea.vmem %s2, %s488
        $region68: #{tpu_custom_call.1} parent=55 // pred_fallthru
          _
      $region56: #{tpu_custom_call.1} parent=5 // pred_fallthru
        _
      %p490 = scmp.le.s32.totalorder 1, %s29
      %p491 = scmp.lt.s32.totalorder %s29, 3
      %p492 = pnand %p490, %p491
      %p493 = pneg %p492
      // Predicated region
      $region69: #{tpu_custom_call.1} parent=5 // pred_check
        _
      $region70: #{tpu_custom_call.1} parent=5 // pred_check_branch
        %495 = sbr.rel (%p492) target = $region72
      $region71: #{tpu_custom_call.1} parent=5 // pred_region
        %s496 = ssub.s32 %s29, 1
        // Predicated region
        $region73: #{tpu_custom_call.1} parent=71 // pred_check
          %p497 = pneg %p142
        $region74: #{tpu_custom_call.1} parent=71 // pred_check_branch
          %499 = sbr.rel (%p497) target = $region76
        $region75: #{tpu_custom_call.1} parent=71 // pred_region
          %500 = dma.done [#allocation5], 256
        $region76: #{tpu_custom_call.1} parent=71 // pred_fallthru
          _
        // Predicated region
        $region77: #{tpu_custom_call.1} parent=71 // pred_check
          %p501 = pneg %p184
        $region78: #{tpu_custom_call.1} parent=71 // pred_check_branch
          %503 = sbr.rel (%p501) target = $region80
        $region79: #{tpu_custom_call.1} parent=71 // pred_region
          %504 = dma.done [#allocation8], 256
        $region80: #{tpu_custom_call.1} parent=71 // pred_fallthru
          _
        // Predicated region
        $region81: #{tpu_custom_call.1} parent=71 // pred_check
          %p505 = pneg %p226
        $region82: #{tpu_custom_call.1} parent=71 // pred_check_branch
          %507 = sbr.rel (%p505) target = $region84
        $region83: #{tpu_custom_call.1} parent=71 // pred_region
          %508 = dma.done [#allocation8], 256
        $region84: #{tpu_custom_call.1} parent=71 // pred_fallthru
          _
        %p509 = scmp.lt.s32.totalorder %s38, 1
        %s510 = scalar_select %p509, %s38, 1
        %p511 = scmp.lt.s32.totalorder %s39, 0
        %s512 = scalar_select %p511, %s39, 0
        %s513 = sadd.s32 %s512, %s510
        %s514 = smul.addr %s513, 8
        %s515 = scalar_lea.vmem %s0, %s514
        %p516 = pneg %p69
        %p517 = pneg %p66
        %p518 = scmp.lt.s32.totalorder %s38, 1
        %s519 = scalar_select %p518, %s38, 1
        %s520 = smul.addr %s519, 8
        %s521 = scalar_lea.vmem %s1, %s520
        %p522 = pneg %p95
        %p523 = pneg %p92
        %p524 = scmp.lt.s32.totalorder %s38, 1
        %s525 = scalar_select %p524, %s38, 1
        %s526 = smul.addr %s525, 8
        %s527 = scalar_lea.vmem %s2, %s526
        %p528 = pneg %p121
        %p529 = pneg %p118
        %p530 = pneg %p142
        %p531 = pneg %p139
        %p532 = pneg %p163
        %p533 = pneg %p160
        %p534 = pneg %p184
        %p535 = pneg %p181
        %p536 = pneg %p205
        %p537 = pneg %p202
        %p538 = pneg %p226
        %p539 = pneg %p223
        %p540 = pneg %p247
        %p541 = pneg %p244
        %p542 = pneg %p268
        %p543 = pneg %p265
        %p544 = pneg %p289
        %p545 = pneg %p286
        %p546 = pneg %p310
        %p547 = pneg %p307
        %p548 = pneg %p331
        %p549 = pneg %p328
        %p550 = pneg %p359
        %p551 = pneg %p356
        %s552 = sand.u32 %s346, 1
        %s553 = scalar_lea.sflag [#allocation6], %s552
        %s554 = sand.u32 %s346, 1
        %s555 = smul.addr %s554, 8
        %s556 = scalar_lea.vmem [#allocation10], %s555
        %p557 = pneg %p387
        %p558 = pneg %p384
        %s559 = sand.u32 %s374, 1
        %s560 = scalar_lea.sflag [#allocation12], %s559
        %s561 = sand.u32 %s374, 1
        %s562 = smul.addr %s561, 32
        %s563 = scalar_lea.vmem [#allocation11], %s562
        %p564 = scmp.lt.s32.totalorder %s38, 1
        %s565 = scalar_select %p564, %s38, 1
        %p566 = scmp.lt.s32.totalorder %s39, 0
        %s567 = scalar_select %p566, %s39, 0
        %s568 = sadd.s32 %s567, %s565
        %s569 = smul.addr %s568, 8
        %s570 = scalar_lea.vmem %s0, %s569
        %p571 = scmp.lt.s32.totalorder %s38, 1
        %s572 = scalar_select %p571, %s38, 1
        %s573 = smul.addr %s572, 8
        %s574 = scalar_lea.vmem %s1, %s573
        %p575 = scmp.lt.s32.totalorder %s38, 1
        %s576 = scalar_select %p575, %s38, 1
        %s577 = smul.addr %s576, 8
        %s578 = scalar_lea.vmem %s2, %s577
        %p580 = scmp.eq.s32.totalorder %s39, 0
        // Predicated region
        $region85: #{tpu_custom_call.1} parent=71 // pred_check
          %p581 = pneg %p580
        $region86: #{tpu_custom_call.1} parent=71 // pred_check_branch
          %583 = sbr.rel (%p581) target = $region88
        $region87: #{tpu_custom_call.1} parent=71 // pred_region
          %v584 = vld [vmem:[%s574] sm:$0xff]
          %v585 = vpack.c.bf16 %v584, %v584
          %v586 = vld [vmem:[%s578] sm:$0xff]
          %v587 = vpack.c.bf16 %v586, %v586
          %v588 = vld [vmem:[#allocation7] sm:$0xf]
          %v589 = vld [vmem:[#allocation7 + $0x4] sm:$0xf]
          %v590 = vld [vmem:[#allocation7 + $0x8] sm:$0xf]
          %v591 = vld [vmem:[#allocation7 + $0xc] sm:$0xf]
          %v592 = vld [vmem:[%s6] sm:$0x1]
          %v594 = vlaneseq
          %v595 = vshrl.u32 %v594, 7
          %v596 = vsub.s32 0, %v595
          %v597 = vrot.slane %v592, %v596
          %v603 = vunpack.c.l.b16 %v588
          %v604 = vunpack.c.l.b16 %v589
          %v605 = vunpack.c.l.b16 %v590
          %v606 = vunpack.c.l.b16 %v591
          %v607 = vpack.c.b16 %v604, %v603
          %v608 = vpack.c.b16 %v606, %v605
          %vm611 = vcmask 261120
          %v613 = vsel %vm611, %v585, 0
          %615 = vmatprep.subr.bf16.mxu0 0
          %616 = vmatpush1.bf16.msra.mxu0 %v607
          %617 = vmatprep.subr.bf16.mxu0 0
          %618 = vmatpush1.bf16.msra.mxu0 %v608
          %619 = vmatprep.subr.bf16.mxu0 0
          %620 = vmatpush1.bf16.msra.mxu0 0
          %621 = vmatprep.subr.bf16.mxu0 0
          %622 = vmatpush1.bf16.msra.mxu0 0
          %623 = vmatprep.subr.bf16.mxu0 0
          %624 = vmatpush1.bf16.msra.mxu0 0
          %625 = vmatprep.subr.bf16.mxu0 0
          %626 = vmatpush1.bf16.msra.mxu0 0
          %627 = vmatprep.subr.bf16.mxu0 0
          %628 = vmatpush1.bf16.msra.mxu0 0
          %629 = vmatprep.subr.bf16.mxu0 0
          %630 = vmatpush1.bf16.msra.mxu0 0
          %631 = vmatprep.subr.bf16.mxu0 0
          %632 = vmatpush1.bf16.msra.mxu0 0
          %633 = vmatprep.subr.bf16.mxu0 0
          %634 = vmatpush1.bf16.msra.mxu0 0
          %635 = vmatprep.subr.bf16.mxu0 0
          %636 = vmatpush1.bf16.msra.mxu0 0
          %637 = vmatprep.subr.bf16.mxu0 0
          %638 = vmatpush1.bf16.msra.mxu0 0
          %639 = vmatprep.subr.bf16.mxu0 0
          %640 = vmatpush1.bf16.msra.mxu0 0
          %641 = vmatprep.subr.bf16.mxu0 0
          %642 = vmatpush1.bf16.msra.mxu0 0
          %643 = vmatprep.subr.bf16.mxu0 0
          %644 = vmatpush1.bf16.msra.mxu0 0
          %645 = vmatprep.subr.bf16.mxu0 0
          %646 = vmatpush1.bf16.msra.mxu0 0
          %647 = vmatprep.mubr.bf16.mxu0 0
          %648 = vmatmul.mubr.bf16.gmra.mrb[0].mxu0 %v613
          %v649 = vpop.f32.mrb[0].mxu0
          %v650 = vadd.f32 %v597, %v649
          %v651 = vpop.f32.mrb[0].mxu0
          %v652 = vpop.f32.mrb[0].mxu0
          %v653 = vpop.f32.mrb[0].mxu0
          %654 = vdwg.mxu0
          %v655 = vld [vmem:[#allocation9] sm:$0xf]
          %v656 = vld [vmem:[#allocation9 + $0x4] sm:$0xf]
          %v657 = vld [vmem:[#allocation9 + $0x8] sm:$0xf]
          %v658 = vld [vmem:[#allocation9 + $0xc] sm:$0xf]
          %v659 = vld [vmem:[%s8] sm:$0x1]
          %v661 = vlaneseq
          %v662 = vshrl.u32 %v661, 7
          %v663 = vsub.s32 0, %v662
          %v664 = vrot.slane %v659, %v663
          %v670 = vunpack.c.l.b16 %v655
          %v671 = vunpack.c.l.b16 %v656
          %v672 = vunpack.c.l.b16 %v657
          %v673 = vunpack.c.l.b16 %v658
          %v674 = vpack.c.b16 %v671, %v670
          %v675 = vpack.c.b16 %v673, %v672
          %v679 = vsel %vm611, %v587, 0
          %681 = vmatprep.subr.bf16.mxu0 0
          %682 = vmatpush1.bf16.msra.mxu0 %v674
          %683 = vmatprep.subr.bf16.mxu0 0
          %684 = vmatpush1.bf16.msra.mxu0 %v675
          %685 = vmatprep.subr.bf16.mxu0 0
          %686 = vmatpush1.bf16.msra.mxu0 0
          %687 = vmatprep.subr.bf16.mxu0 0
          %688 = vmatpush1.bf16.msra.mxu0 0
          %689 = vmatprep.subr.bf16.mxu0 0
          %690 = vmatpush1.bf16.msra.mxu0 0
          %691 = vmatprep.subr.bf16.mxu0 0
          %692 = vmatpush1.bf16.msra.mxu0 0
          %693 = vmatprep.subr.bf16.mxu0 0
          %694 = vmatpush1.bf16.msra.mxu0 0
          %695 = vmatprep.subr.bf16.mxu0 0
          %696 = vmatpush1.bf16.msra.mxu0 0
          %697 = vmatprep.subr.bf16.mxu0 0
          %698 = vmatpush1.bf16.msra.mxu0 0
          %699 = vmatprep.subr.bf16.mxu0 0
          %700 = vmatpush1.bf16.msra.mxu0 0
          %701 = vmatprep.subr.bf16.mxu0 0
          %702 = vmatpush1.bf16.msra.mxu0 0
          %703 = vmatprep.subr.bf16.mxu0 0
          %704 = vmatpush1.bf16.msra.mxu0 0
          %705 = vmatprep.subr.bf16.mxu0 0
          %706 = vmatpush1.bf16.msra.mxu0 0
          %707 = vmatprep.subr.bf16.mxu0 0
          %708 = vmatpush1.bf16.msra.mxu0 0
          %709 = vmatprep.subr.bf16.mxu0 0
          %710 = vmatpush1.bf16.msra.mxu0 0
          %711 = vmatprep.subr.bf16.mxu0 0
          %712 = vmatpush1.bf16.msra.mxu0 0
          %713 = vmatprep.mubr.bf16.mxu0 0
          %714 = vmatmul.mubr.bf16.gmra.mrb[0].mxu0 %v679
          %v715 = vpop.f32.mrb[0].mxu0
          %v716 = vadd.f32 %v664, %v715
          %v717 = vpop.f32.mrb[0].mxu0
          %v718 = vpop.f32.mrb[0].mxu0
          %v719 = vpop.f32.mrb[0].mxu0
          %720 = vdwg.mxu0
          %v721 = vpack.c.bf16 %v650, %v650
          %vm722 = vcmask 519168
          %723 = vst.msk [vmem:[#allocation2] sm:$0xf] %vm722, %v721
          %v724 = vpack.c.bf16 %v716, %v716
          %725 = vst.msk [vmem:[#allocation3] sm:$0xf] %vm722, %v724
        $region88: #{tpu_custom_call.1} parent=71 // pred_fallthru
          _
        %v726 = vld [vmem:[%s570] sm:$0xff]
        %v727 = vpack.c.bf16 %v726, %v726
        %v728 = vld [vmem:[#allocation4] sm:$0xf]
        %v729 = vld [vmem:[#allocation4 + $0x4] sm:$0xf]
        %v730 = vld [vmem:[#allocation4 + $0x8] sm:$0xf]
        %v731 = vld [vmem:[#allocation4 + $0xc] sm:$0xf]
        %v732 = vld [vmem:[%s4] sm:$0x1]
        %v734 = vlaneseq
        %v735 = vshrl.u32 %v734, 7
        %v736 = vsub.s32 0, %v735
        %v737 = vrot.slane %v732, %v736
        %v743 = vunpack.c.l.b16 %v728
        %v744 = vunpack.c.l.b16 %v729
        %v745 = vunpack.c.l.b16 %v730
        %v746 = vunpack.c.l.b16 %v731
        %v747 = vpack.c.b16 %v744, %v743
        %v748 = vpack.c.b16 %v746, %v745
        %vm751 = vcmask 261120
        %v753 = vsel %vm751, %v727, 0
        %755 = vmatprep.subr.bf16.mxu0 0
        %756 = vmatpush1.bf16.msra.mxu0 %v747
        %757 = vmatprep.subr.bf16.mxu0 0
        %758 = vmatpush1.bf16.msra.mxu0 %v748
        %759 = vmatprep.subr.bf16.mxu0 0
        %760 = vmatpush1.bf16.msra.mxu0 0
        %761 = vmatprep.subr.bf16.mxu0 0
        %762 = vmatpush1.bf16.msra.mxu0 0
        %763 = vmatprep.subr.bf16.mxu0 0
        %764 = vmatpush1.bf16.msra.mxu0 0
        %765 = vmatprep.subr.bf16.mxu0 0
        %766 = vmatpush1.bf16.msra.mxu0 0
        %767 = vmatprep.subr.bf16.mxu0 0
        %768 = vmatpush1.bf16.msra.mxu0 0
        %769 = vmatprep.subr.bf16.mxu0 0
        %770 = vmatpush1.bf16.msra.mxu0 0
        %771 = vmatprep.subr.bf16.mxu0 0
        %772 = vmatpush1.bf16.msra.mxu0 0
        %773 = vmatprep.subr.bf16.mxu0 0
        %774 = vmatpush1.bf16.msra.mxu0 0
        %775 = vmatprep.subr.bf16.mxu0 0
        %776 = vmatpush1.bf16.msra.mxu0 0
        %777 = vmatprep.subr.bf16.mxu0 0
        %778 = vmatpush1.bf16.msra.mxu0 0
        %779 = vmatprep.subr.bf16.mxu0 0
        %780 = vmatpush1.bf16.msra.mxu0 0
        %781 = vmatprep.subr.bf16.mxu0 0
        %782 = vmatpush1.bf16.msra.mxu0 0
        %783 = vmatprep.subr.bf16.mxu0 0
        %784 = vmatpush1.bf16.msra.mxu0 0
        %785 = vmatprep.subr.bf16.mxu0 0
        %786 = vmatpush1.bf16.msra.mxu0 0
        %787 = vmatprep.mubr.bf16.mxu0 0
        %788 = vmatmul.mubr.bf16.gmra.mrb[0].mxu0 %v753
        %v789 = vpop.f32.mrb[0].mxu0
        %v790 = vadd.f32 %v737, %v789
        %v791 = vpop.f32.mrb[0].mxu0
        %v792 = vpop.f32.mrb[0].mxu0
        %v793 = vpop.f32.mrb[0].mxu0
        %794 = vdwg.mxu0
        %v795 = vmul.f32 %v790, 0.25
        %v796 = vpack.c.bf16 %v795, %v795
        %v797 = vld [vmem:[#allocation2] sm:$0xf]
        %v798 = vld [vmem:[#allocation3] sm:$0xf]
        %v799 = vld [vmem:[%s9] sm:$0xf]
        %v800 = vld [vmem:[%s9 + $0x4] sm:$0xf]
        %v801 = vld [vmem:[%s9 + $0x8] sm:$0xf]
        %v802 = vld [vmem:[%s9 + $0xc] sm:$0xf]
        %v803 = vld [vmem:[%s9 + $0x10] sm:$0xf]
        %v804 = vld [vmem:[%s9 + $0x14] sm:$0xf]
        %v805 = vld [vmem:[%s9 + $0x18] sm:$0xf]
        %v806 = vld [vmem:[%s9 + $0x1c] sm:$0xf]
        %vm807 = vcmask 130048
        %v809 = vsel %vm807, %v796, 0
        %v812 = vsel %vm807, %v797, 0
        %814 = vmatprep.subr.bf16.mxu0 0
        %815 = vmatpush1.bf16.xpose.msra.mxu0 %v812
        %816 = vmatprep.subr.bf16.mxu0 0
        %817 = vmatpush1.bf16.xpose.msra.mxu0 0
        %818 = vmatprep.subr.bf16.mxu0 0
        %819 = vmatpush1.bf16.xpose.msra.mxu0 0
        %820 = vmatprep.subr.bf16.mxu0 0
        %821 = vmatpush1.bf16.xpose.msra.mxu0 0
        %822 = vmatprep.subr.bf16.mxu0 0
        %823 = vmatpush1.bf16.xpose.msra.mxu0 0
        %824 = vmatprep.subr.bf16.mxu0 0
        %825 = vmatpush1.bf16.xpose.msra.mxu0 0
        %826 = vmatprep.subr.bf16.mxu0 0
        %827 = vmatpush1.bf16.xpose.msra.mxu0 0
        %828 = vmatprep.subr.bf16.mxu0 0
        %829 = vmatpush1.bf16.xpose.msra.mxu0 0
        %830 = vmatprep.subr.bf16.mxu0 0
        %831 = vmatpush1.bf16.xpose.msra.mxu0 0
        %832 = vmatprep.subr.bf16.mxu0 0
        %833 = vmatpush1.bf16.xpose.msra.mxu0 0
        %834 = vmatprep.subr.bf16.mxu0 0
        %835 = vmatpush1.bf16.xpose.msra.mxu0 0
        %836 = vmatprep.subr.bf16.mxu0 0
        %837 = vmatpush1.bf16.xpose.msra.mxu0 0
        %838 = vmatprep.subr.bf16.mxu0 0
        %839 = vmatpush1.bf16.xpose.msra.mxu0 0
        %840 = vmatprep.subr.bf16.mxu0 0
        %841 = vmatpush1.bf16.xpose.msra.mxu0 0
        %842 = vmatprep.subr.bf16.mxu0 0
        %843 = vmatpush1.bf16.xpose.msra.mxu0 0
        %844 = vmatprep.subr.bf16.mxu0 0
        %845 = vmatpush1.bf16.xpose.msra.mxu0 0
        %846 = vmatprep.mubr.bf16.mxu0 0
        %847 = vmatmul.mubr.bf16.gmra.mrb[0].mxu0 %v809
        %v848 = vpop.f32.mrb[0].mxu0
        %v849 = vadd.f32 0.0, %v848
        %v850 = vpop.f32.mrb[0].mxu0
        %v851 = vpop.f32.mrb[0].mxu0
        %v852 = vpop.f32.mrb[0].mxu0
        %853 = vdwg.mxu0
        %vm854 = vcmask 64512
        %v855 = vsel %vm854, %v849, -inf
        %856 = vmax.xlane.f32.xlu0 %v855
        %v857 = vpop.xlane.xlu0 %856
        %v858 = vsub.f32 %v849, %v857
        %v859 = vmul.f32 %v858, 1.442695
        %v860 = vpow.pop %v859
        %v861 = vsel %vm854, %v860, 0.0
        %862 = vadd.xlane.f32.xlu0 %v861
        %v863 = vpop.xlane.xlu0 %862
        %v864 = vrcp.pop %v863
        %v865 = vmul.f32 %v860, %v864
        %866 = vst.msk [vmem:[%s563] sm:$0xff] %vm854, %v865
        %v867 = vpack.c.bf16 %v865, %v865
        %v869 = vsel %vm854, %v867, 0
        %vm871 = vcmask 1043456
        %v873 = vsel %vm871, %v798, 0
        %875 = vmatprep.subr.bf16.mxu0 0
        %876 = vmatpush1.bf16.msra.mxu0 %v873
        %877 = vmatprep.subr.bf16.mxu0 0
        %878 = vmatpush1.bf16.msra.mxu0 0
        %879 = vmatprep.subr.bf16.mxu0 0
        %880 = vmatpush1.bf16.msra.mxu0 0
        %881 = vmatprep.subr.bf16.mxu0 0
        %882 = vmatpush1.bf16.msra.mxu0 0
        %883 = vmatprep.subr.bf16.mxu0 0
        %884 = vmatpush1.bf16.msra.mxu0 0
        %885 = vmatprep.subr.bf16.mxu0 0
        %886 = vmatpush1.bf16.msra.mxu0 0
        %887 = vmatprep.subr.bf16.mxu0 0
        %888 = vmatpush1.bf16.msra.mxu0 0
        %889 = vmatprep.subr.bf16.mxu0 0
        %890 = vmatpush1.bf16.msra.mxu0 0
        %891 = vmatprep.subr.bf16.mxu0 0
        %892 = vmatpush1.bf16.msra.mxu0 0
        %893 = vmatprep.subr.bf16.mxu0 0
        %894 = vmatpush1.bf16.msra.mxu0 0
        %895 = vmatprep.subr.bf16.mxu0 0
        %896 = vmatpush1.bf16.msra.mxu0 0
        %897 = vmatprep.subr.bf16.mxu0 0
        %898 = vmatpush1.bf16.msra.mxu0 0
        %899 = vmatprep.subr.bf16.mxu0 0
        %900 = vmatpush1.bf16.msra.mxu0 0
        %901 = vmatprep.subr.bf16.mxu0 0
        %902 = vmatpush1.bf16.msra.mxu0 0
        %903 = vmatprep.subr.bf16.mxu0 0
        %904 = vmatpush1.bf16.msra.mxu0 0
        %905 = vmatprep.subr.bf16.mxu0 0
        %906 = vmatpush1.bf16.msra.mxu0 0
        %907 = vmatprep.mubr.bf16.mxu0 0
        %908 = vmatmul.mubr.bf16.gmra.mrb[0].mxu0 %v869
        %v909 = vpop.f32.mrb[0].mxu0
        %v910 = vadd.f32 0.0, %v909
        %v911 = vpop.f32.mrb[0].mxu0
        %v912 = vpop.f32.mrb[0].mxu0
        %v913 = vpop.f32.mrb[0].mxu0
        %914 = vdwg.mxu0
        %v915 = vpack.c.bf16 %v910, %v910
        %917 = vrot.lane.b32.xlu0 %v796, 112
        %v918 = vpop.permute.xlu0 %917
        %v920 = vunpack.c.l.b16 %v797
        %v921 = vpack.c.b16 %v920, %v920
        %922 = vrot.lane.b32.xlu0 %v921, 112
        %v923 = vpop.permute.xlu0 %922
        %v925 = vsel %vm807, %v918, 0
        %v928 = vsel %vm807, %v923, 0
        %930 = vmatprep.subr.bf16.mxu0 0
        %931 = vmatpush1.bf16.xpose.msra.mxu0 %v928
        %932 = vmatprep.subr.bf16.mxu0 0
        %933 = vmatpush1.bf16.xpose.msra.mxu0 0
        %934 = vmatprep.subr.bf16.mxu0 0
        %935 = vmatpush1.bf16.xpose.msra.mxu0 0
        %936 = vmatprep.subr.bf16.mxu0 0
        %937 = vmatpush1.bf16.xpose.msra.mxu0 0
        %938 = vmatprep.subr.bf16.mxu0 0
        %939 = vmatpush1.bf16.xpose.msra.mxu0 0
        %940 = vmatprep.subr.bf16.mxu0 0
        %941 = vmatpush1.bf16.xpose.msra.mxu0 0
        %942 = vmatprep.subr.bf16.mxu0 0
        %943 = vmatpush1.bf16.xpose.msra.mxu0 0
        %944 = vmatprep.subr.bf16.mxu0 0
        %945 = vmatpush1.bf16.xpose.msra.mxu0 0
        %946 = vmatprep.subr.bf16.mxu0 0
        %947 = vmatpush1.bf16.xpose.msra.mxu0 0
        %948 = vmatprep.subr.bf16.mxu0 0
        %949 = vmatpush1.bf16.xpose.msra.mxu0 0
        %950 = vmatprep.subr.bf16.mxu0 0
        %951 = vmatpush1.bf16.xpose.msra.mxu0 0
        %952 = vmatprep.subr.bf16.mxu0 0
        %953 = vmatpush1.bf16.xpose.msra.mxu0 0
        %954 = vmatprep.subr.bf16.mxu0 0
        %955 = vmatpush1.bf16.xpose.msra.mxu0 0
        %956 = vmatprep.subr.bf16.mxu0 0
        %957 = vmatpush1.bf16.xpose.msra.mxu0 0
        %958 = vmatprep.subr.bf16.mxu0 0
        %959 = vmatpush1.bf16.xpose.msra.mxu0 0
        %960 = vmatprep.subr.bf16.mxu0 0
        %961 = vmatpush1.bf16.xpose.msra.mxu0 0
        %962 = vmatprep.mubr.bf16.mxu0 0
        %963 = vmatmul.mubr.bf16.gmra.mrb[0].mxu0 %v925
        %v964 = vpop.f32.mrb[0].mxu0
        %v965 = vadd.f32 0.0, %v964
        %v966 = vpop.f32.mrb[0].mxu0
        %v967 = vpop.f32.mrb[0].mxu0
        %v968 = vpop.f32.mrb[0].mxu0
        %969 = vdwg.mxu0
        %v970 = vsel %vm854, %v965, -inf
        %971 = vmax.xlane.f32.xlu0 %v970
        %v972 = vpop.xlane.xlu0 %971
        %v973 = vsub.f32 %v965, %v972
        %v974 = vmul.f32 %v973, 1.442695
        %v975 = vpow.pop %v974
        %v976 = vsel %vm854, %v975, 0.0
        %977 = vadd.xlane.f32.xlu0 %v976
        %v978 = vpop.xlane.xlu0 %977
        %v979 = vrcp.pop %v978
        %v980 = vmul.f32 %v975, %v979
        %s981 = scalar_lea.vmem %s563, 8 [#allocation11]
        %982 = vst.msk [vmem:[%s981] sm:$0xff] %vm854, %v980
        %v983 = vpack.c.bf16 %v980, %v980
        %v985 = vunpack.c.l.b16 %v798
        %v986 = vpack.c.b16 %v985, %v985
        %987 = vrot.lane.b32.xlu0 %v986, 112
        %v988 = vpop.permute.xlu0 %987
        %v990 = vsel %vm854, %v983, 0
        %v993 = vsel %vm871, %v988, 0
        %995 = vmatprep.subr.bf16.mxu0 0
        %996 = vmatpush1.bf16.msra.mxu0 %v993
        %997 = vmatprep.subr.bf16.mxu0 0
        %998 = vmatpush1.bf16.msra.mxu0 0
        %999 = vmatprep.subr.bf16.mxu0 0
        %1000 = vmatpush1.bf16.msra.mxu0 0
        %1001 = vmatprep.subr.bf16.mxu0 0
        %1002 = vmatpush1.bf16.msra.mxu0 0
        %1003 = vmatprep.subr.bf16.mxu0 0
        %1004 = vmatpush1.bf16.msra.mxu0 0
        %1005 = vmatprep.subr.bf16.mxu0 0
        %1006 = vmatpush1.bf16.msra.mxu0 0
        %1007 = vmatprep.subr.bf16.mxu0 0
        %1008 = vmatpush1.bf16.msra.mxu0 0
        %1009 = vmatprep.subr.bf16.mxu0 0
        %1010 = vmatpush1.bf16.msra.mxu0 0
        %1011 = vmatprep.subr.bf16.mxu0 0
        %1012 = vmatpush1.bf16.msra.mxu0 0
        %1013 = vmatprep.subr.bf16.mxu0 0
        %1014 = vmatpush1.bf16.msra.mxu0 0
        %1015 = vmatprep.subr.bf16.mxu0 0
        %1016 = vmatpush1.bf16.msra.mxu0 0
        %1017 = vmatprep.subr.bf16.mxu0 0
        %1018 = vmatpush1.bf16.msra.mxu0 0
        %1019 = vmatprep.subr.bf16.mxu0 0
        %1020 = vmatpush1.bf16.msra.mxu0 0
        %1021 = vmatprep.subr.bf16.mxu0 0
        %1022 = vmatpush1.bf16.msra.mxu0 0
        %1023 = vmatprep.subr.bf16.mxu0 0
        %1024 = vmatpush1.bf16.msra.mxu0 0
        %1025 = vmatprep.subr.bf16.mxu0 0
        %1026 = vmatpush1.bf16.msra.mxu0 0
        %1027 = vmatprep.mubr.bf16.mxu0 0
        %1028 = vmatmul.mubr.bf16.gmra.mrb[0].mxu0 %v990
        %v1029 = vpop.f32.mrb[0].mxu0
        %v1030 = vadd.f32 0.0, %v1029
        %v1031 = vpop.f32.mrb[0].mxu0
        %v1032 = vpop.f32.mrb[0].mxu0
        %v1033 = vpop.f32.mrb[0].mxu0
        %1034 = vdwg.mxu0
        %v1035 = vpack.c.bf16 %v1030, %v1030
        %v1038 = vunpack.c.l.b16 %v801
        %v1039 = vunpack.c.l.b16 %v802
        %v1040 = vpack.c.b16 %v1039, %v1038
        %v1043 = vsel %vm807, %v1035, 0
        %1045 = vmatprep.subr.bf16.mxu0 0
        %1046 = vmatpush1.bf16.msra.mxu0 %v1040
        %1047 = vmatprep.subr.bf16.mxu0 0
        %1048 = vmatpush1.bf16.msra.mxu0 0
        %1049 = vmatprep.subr.bf16.mxu0 0
        %1050 = vmatpush1.bf16.msra.mxu0 0
        %1051 = vmatprep.subr.bf16.mxu0 0
        %1052 = vmatpush1.bf16.msra.mxu0 0
        %1053 = vmatprep.subr.bf16.mxu0 0
        %1054 = vmatpush1.bf16.msra.mxu0 0
        %1055 = vmatprep.subr.bf16.mxu0 0
        %1056 = vmatpush1.bf16.msra.mxu0 0
        %1057 = vmatprep.subr.bf16.mxu0 0
        %1058 = vmatpush1.bf16.msra.mxu0 0
        %1059 = vmatprep.subr.bf16.mxu0 0
        %1060 = vmatpush1.bf16.msra.mxu0 0
        %1061 = vmatprep.subr.bf16.mxu0 0
        %1062 = vmatpush1.bf16.msra.mxu0 0
        %1063 = vmatprep.subr.bf16.mxu0 0
        %1064 = vmatpush1.bf16.msra.mxu0 0
        %1065 = vmatprep.subr.bf16.mxu0 0
        %1066 = vmatpush1.bf16.msra.mxu0 0
        %1067 = vmatprep.subr.bf16.mxu0 0
        %1068 = vmatpush1.bf16.msra.mxu0 0
        %1069 = vmatprep.subr.bf16.mxu0 0
        %1070 = vmatpush1.bf16.msra.mxu0 0
        %1071 = vmatprep.subr.bf16.mxu0 0
        %1072 = vmatpush1.bf16.msra.mxu0 0
        %1073 = vmatprep.subr.bf16.mxu0 0
        %1074 = vmatpush1.bf16.msra.mxu0 0
        %1075 = vmatprep.subr.bf16.mxu0 0
        %1076 = vmatpush1.bf16.msra.mxu0 0
        %1077 = vmatprep.mubr.bf16.mxu0 0
        %1078 = vmatmul.mubr.bf16.gmra.mrb[0].mxu0 %v1043
        %v1079 = vpop.f32.mrb[0].mxu0
        %v1080 = vadd.f32 0.0, %v1079
        %v1081 = vpop.f32.mrb[0].mxu0
        %v1082 = vpop.f32.mrb[0].mxu0
        %v1083 = vpop.f32.mrb[0].mxu0
        %1084 = vdwg.mxu0
        %v1087 = vunpack.c.l.b16 %v799
        %v1088 = vunpack.c.l.b16 %v800
        %v1089 = vpack.c.b16 %v1088, %v1087
        %v1092 = vsel %vm807, %v915, 0
        %1094 = vmatprep.subr.bf16.mxu0 0
        %1095 = vmatpush1.bf16.msra.mxu0 %v1089
        %1096 = vmatprep.subr.bf16.mxu0 0
        %1097 = vmatpush1.bf16.msra.mxu0 0
        %1098 = vmatprep.subr.bf16.mxu0 0
        %1099 = vmatpush1.bf16.msra.mxu0 0
        %1100 = vmatprep.subr.bf16.mxu0 0
        %1101 = vmatpush1.bf16.msra.mxu0 0
        %1102 = vmatprep.subr.bf16.mxu0 0
        %1103 = vmatpush1.bf16.msra.mxu0 0
        %1104 = vmatprep.subr.bf16.mxu0 0
        %1105 = vmatpush1.bf16.msra.mxu0 0
        %1106 = vmatprep.subr.bf16.mxu0 0
        %1107 = vmatpush1.bf16.msra.mxu0 0
        %1108 = vmatprep.subr.bf16.mxu0 0
        %1109 = vmatpush1.bf16.msra.mxu0 0
        %1110 = vmatprep.subr.bf16.mxu0 0
        %1111 = vmatpush1.bf16.msra.mxu0 0
        %1112 = vmatprep.subr.bf16.mxu0 0
        %1113 = vmatpush1.bf16.msra.mxu0 0
        %1114 = vmatprep.subr.bf16.mxu0 0
        %1115 = vmatpush1.bf16.msra.mxu0 0
        %1116 = vmatprep.subr.bf16.mxu0 0
        %1117 = vmatpush1.bf16.msra.mxu0 0
        %1118 = vmatprep.subr.bf16.mxu0 0
        %1119 = vmatpush1.bf16.msra.mxu0 0
        %1120 = vmatprep.subr.bf16.mxu0 0
        %1121 = vmatpush1.bf16.msra.mxu0 0
        %1122 = vmatprep.subr.bf16.mxu0 0
        %1123 = vmatpush1.bf16.msra.mxu0 0
        %1124 = vmatprep.subr.bf16.mxu0 0
        %1125 = vmatpush1.bf16.msra.mxu0 0
        %1126 = vmatprep.mubr.bf16.mxu0 0
        %1127 = vmatmul.mubr.bf16.gmra.mrb[0].mxu0 %v1092
        %v1128 = vpop.f32.mrb[0].mxu0
        %v1129 = vadd.f32 %v1080, %v1128
        %v1130 = vpop.f32.mrb[0].mxu0
        %v1131 = vpop.f32.mrb[0].mxu0
        %v1132 = vpop.f32.mrb[0].mxu0
        %1133 = vdwg.mxu0
        %1134 = vrot.lane.b32.xlu0 %v796, 96
        %v1135 = vpop.permute.xlu0 %1134
        %1136 = vrot.lane.b32.xlu0 %v921, 96
        %v1137 = vpop.permute.xlu0 %1136
        %v1139 = vsel %vm807, %v1135, 0
        %v1142 = vsel %vm807, %v1137, 0
        %1144 = vmatprep.subr.bf16.mxu0 0
        %1145 = vmatpush1.bf16.xpose.msra.mxu0 %v1142
        %1146 = vmatprep.subr.bf16.mxu0 0
        %1147 = vmatpush1.bf16.xpose.msra.mxu0 0
        %1148 = vmatprep.subr.bf16.mxu0 0
        %1149 = vmatpush1.bf16.xpose.msra.mxu0 0
        %1150 = vmatprep.subr.bf16.mxu0 0
        %1151 = vmatpush1.bf16.xpose.msra.mxu0 0
        %1152 = vmatprep.subr.bf16.mxu0 0
        %1153 = vmatpush1.bf16.xpose.msra.mxu0 0
        %1154 = vmatprep.subr.bf16.mxu0 0
        %1155 = vmatpush1.bf16.xpose.msra.mxu0 0
        %1156 = vmatprep.subr.bf16.mxu0 0
        %1157 = vmatpush1.bf16.xpose.msra.mxu0 0
        %1158 = vmatprep.subr.bf16.mxu0 0
        %1159 = vmatpush1.bf16.xpose.msra.mxu0 0
        %1160 = vmatprep.subr.bf16.mxu0 0
        %1161 = vmatpush1.bf16.xpose.msra.mxu0 0
        %1162 = vmatprep.subr.bf16.mxu0 0
        %1163 = vmatpush1.bf16.xpose.msra.mxu0 0
        %1164 = vmatprep.subr.bf16.mxu0 0
        %1165 = vmatpush1.bf16.xpose.msra.mxu0 0
        %1166 = vmatprep.subr.bf16.mxu0 0
        %1167 = vmatpush1.bf16.xpose.msra.mxu0 0
        %1168 = vmatprep.subr.bf16.mxu0 0
        %1169 = vmatpush1.bf16.xpose.msra.mxu0 0
        %1170 = vmatprep.subr.bf16.mxu0 0
        %1171 = vmatpush1.bf16.xpose.msra.mxu0 0
        %1172 = vmatprep.subr.bf16.mxu0 0
        %1173 = vmatpush1.bf16.xpose.msra.mxu0 0
        %1174 = vmatprep.subr.bf16.mxu0 0
        %1175 = vmatpush1.bf16.xpose.msra.mxu0 0
        %1176 = vmatprep.mubr.bf16.mxu0 0
        %1177 = vmatmul.mubr.bf16.gmra.mrb[0].mxu0 %v1139
        %v1178 = vpop.f32.mrb[0].mxu0
        %v1179 = vadd.f32 0.0, %v1178
        %v1180 = vpop.f32.mrb[0].mxu0
        %v1181 = vpop.f32.mrb[0].mxu0
        %v1182 = vpop.f32.mrb[0].mxu0
        %1183 = vdwg.mxu0
        %v1184 = vsel %vm854, %v1179, -inf
        %1185 = vmax.xlane.f32.xlu0 %v1184
        %v1186 = vpop.xlane.xlu0 %1185
        %v1187 = vsub.f32 %v1179, %v1186
        %v1188 = vmul.f32 %v1187, 1.442695
        %v1189 = vpow.pop %v1188
        %v1190 = vsel %vm854, %v1189, 0.0
        %1191 = vadd.xlane.f32.xlu0 %v1190
        %v1192 = vpop.xlane.xlu0 %1191
        %v1193 = vrcp.pop %v1192
        %v1194 = vmul.f32 %v1189, %v1193
        %s1195 = scalar_lea.vmem %s563, 16 [#allocation11]
        %1196 = vst.msk [vmem:[%s1195] sm:$0xff] %vm854, %v1194
        %v1197 = vpack.c.bf16 %v1194, %v1194
        %1198 = vrot.lane.b32.xlu0 %v986, 96
        %v1199 = vpop.permute.xlu0 %1198
        %v1201 = vsel %vm854, %v1197, 0
        %v1204 = vsel %vm871, %v1199, 0
        %1206 = vmatprep.subr.bf16.mxu0 0
        %1207 = vmatpush1.bf16.msra.mxu0 %v1204
        %1208 = vmatprep.subr.bf16.mxu0 0
        %1209 = vmatpush1.bf16.msra.mxu0 0
        %1210 = vmatprep.subr.bf16.mxu0 0
        %1211 = vmatpush1.bf16.msra.mxu0 0
        %1212 = vmatprep.subr.bf16.mxu0 0
        %1213 = vmatpush1.bf16.msra.mxu0 0
        %1214 = vmatprep.subr.bf16.mxu0 0
        %1215 = vmatpush1.bf16.msra.mxu0 0
        %1216 = vmatprep.subr.bf16.mxu0 0
        %1217 = vmatpush1.bf16.msra.mxu0 0
        %1218 = vmatprep.subr.bf16.mxu0 0
        %1219 = vmatpush1.bf16.msra.mxu0 0
        %1220 = vmatprep.subr.bf16.mxu0 0
        %1221 = vmatpush1.bf16.msra.mxu0 0
        %1222 = vmatprep.subr.bf16.mxu0 0
        %1223 = vmatpush1.bf16.msra.mxu0 0
        %1224 = vmatprep.subr.bf16.mxu0 0
        %1225 = vmatpush1.bf16.msra.mxu0 0
        %1226 = vmatprep.subr.bf16.mxu0 0
        %1227 = vmatpush1.bf16.msra.mxu0 0
        %1228 = vmatprep.subr.bf16.mxu0 0
        %1229 = vmatpush1.bf16.msra.mxu0 0
        %1230 = vmatprep.subr.bf16.mxu0 0
        %1231 = vmatpush1.bf16.msra.mxu0 0
        %1232 = vmatprep.subr.bf16.mxu0 0
        %1233 = vmatpush1.bf16.msra.mxu0 0
        %1234 = vmatprep.subr.bf16.mxu0 0
        %1235 = vmatpush1.bf16.msra.mxu0 0
        %1236 = vmatprep.subr.bf16.mxu0 0
        %1237 = vmatpush1.bf16.msra.mxu0 0
        %1238 = vmatprep.mubr.bf16.mxu0 0
        %1239 = vmatmul.mubr.bf16.gmra.mrb[0].mxu0 %v1201
        %v1240 = vpop.f32.mrb[0].mxu0
        %v1241 = vadd.f32 0.0, %v1240
        %v1242 = vpop.f32.mrb[0].mxu0
        %v1243 = vpop.f32.mrb[0].mxu0
        %v1244 = vpop.f32.mrb[0].mxu0
        %1245 = vdwg.mxu0
        %v1246 = vpack.c.bf16 %v1241, %v1241
        %v1249 = vunpack.c.l.b16 %v803
        %v1250 = vunpack.c.l.b16 %v804
        %v1251 = vpack.c.b16 %v1250, %v1249
        %v1254 = vsel %vm807, %v1246, 0
        %1256 = vmatprep.subr.bf16.mxu0 0
        %1257 = vmatpush1.bf16.msra.mxu0 %v1251
        %1258 = vmatprep.subr.bf16.mxu0 0
        %1259 = vmatpush1.bf16.msra.mxu0 0
        %1260 = vmatprep.subr.bf16.mxu0 0
        %1261 = vmatpush1.bf16.msra.mxu0 0
        %1262 = vmatprep.subr.bf16.mxu0 0
        %1263 = vmatpush1.bf16.msra.mxu0 0
        %1264 = vmatprep.subr.bf16.mxu0 0
        %1265 = vmatpush1.bf16.msra.mxu0 0
        %1266 = vmatprep.subr.bf16.mxu0 0
        %1267 = vmatpush1.bf16.msra.mxu0 0
        %1268 = vmatprep.subr.bf16.mxu0 0
        %1269 = vmatpush1.bf16.msra.mxu0 0
        %1270 = vmatprep.subr.bf16.mxu0 0
        %1271 = vmatpush1.bf16.msra.mxu0 0
        %1272 = vmatprep.subr.bf16.mxu0 0
        %1273 = vmatpush1.bf16.msra.mxu0 0
        %1274 = vmatprep.subr.bf16.mxu0 0
        %1275 = vmatpush1.bf16.msra.mxu0 0
        %1276 = vmatprep.subr.bf16.mxu0 0
        %1277 = vmatpush1.bf16.msra.mxu0 0
        %1278 = vmatprep.subr.bf16.mxu0 0
        %1279 = vmatpush1.bf16.msra.mxu0 0
        %1280 = vmatprep.subr.bf16.mxu0 0
        %1281 = vmatpush1.bf16.msra.mxu0 0
        %1282 = vmatprep.subr.bf16.mxu0 0
        %1283 = vmatpush1.bf16.msra.mxu0 0
        %1284 = vmatprep.subr.bf16.mxu0 0
        %1285 = vmatpush1.bf16.msra.mxu0 0
        %1286 = vmatprep.subr.bf16.mxu0 0
        %1287 = vmatpush1.bf16.msra.mxu0 0
        %1288 = vmatprep.mubr.bf16.mxu0 0
        %1289 = vmatmul.mubr.bf16.gmra.mrb[0].mxu0 %v1254
        %v1290 = vpop.f32.mrb[0].mxu0
        %v1291 = vadd.f32 0.0, %v1290
        %v1292 = vpop.f32.mrb[0].mxu0
        %v1293 = vpop.f32.mrb[0].mxu0
        %v1294 = vpop.f32.mrb[0].mxu0
        %1295 = vdwg.mxu0
        %v1296 = vadd.f32 %v1129, %v1291
        %1297 = vrot.lane.b32.xlu0 %v796, 80
        %v1298 = vpop.permute.xlu0 %1297
        %1299 = vrot.lane.b32.xlu0 %v921, 80
        %v1300 = vpop.permute.xlu0 %1299
        %v1302 = vsel %vm807, %v1298, 0
        %v1305 = vsel %vm807, %v1300, 0
        %1307 = vmatprep.subr.bf16.mxu0 0
        %1308 = vmatpush1.bf16.xpose.msra.mxu0 %v1305
        %1309 = vmatprep.subr.bf16.mxu0 0
        %1310 = vmatpush1.bf16.xpose.msra.mxu0 0
        %1311 = vmatprep.subr.bf16.mxu0 0
        %1312 = vmatpush1.bf16.xpose.msra.mxu0 0
        %1313 = vmatprep.subr.bf16.mxu0 0
        %1314 = vmatpush1.bf16.xpose.msra.mxu0 0
        %1315 = vmatprep.subr.bf16.mxu0 0
        %1316 = vmatpush1.bf16.xpose.msra.mxu0 0
        %1317 = vmatprep.subr.bf16.mxu0 0
        %1318 = vmatpush1.bf16.xpose.msra.mxu0 0
        %1319 = vmatprep.subr.bf16.mxu0 0
        %1320 = vmatpush1.bf16.xpose.msra.mxu0 0
        %1321 = vmatprep.subr.bf16.mxu0 0
        %1322 = vmatpush1.bf16.xpose.msra.mxu0 0
        %1323 = vmatprep.subr.bf16.mxu0 0
        %1324 = vmatpush1.bf16.xpose.msra.mxu0 0
        %1325 = vmatprep.subr.bf16.mxu0 0
        %1326 = vmatpush1.bf16.xpose.msra.mxu0 0
        %1327 = vmatprep.subr.bf16.mxu0 0
        %1328 = vmatpush1.bf16.xpose.msra.mxu0 0
        %1329 = vmatprep.subr.bf16.mxu0 0
        %1330 = vmatpush1.bf16.xpose.msra.mxu0 0
        %1331 = vmatprep.subr.bf16.mxu0 0
        %1332 = vmatpush1.bf16.xpose.msra.mxu0 0
        %1333 = vmatprep.subr.bf16.mxu0 0
        %1334 = vmatpush1.bf16.xpose.msra.mxu0 0
        %1335 = vmatprep.subr.bf16.mxu0 0
        %1336 = vmatpush1.bf16.xpose.msra.mxu0 0
        %1337 = vmatprep.subr.bf16.mxu0 0
        %1338 = vmatpush1.bf16.xpose.msra.mxu0 0
        %1339 = vmatprep.mubr.bf16.mxu0 0
        %1340 = vmatmul.mubr.bf16.gmra.mrb[0].mxu0 %v1302
        %v1341 = vpop.f32.mrb[0].mxu0
        %v1342 = vadd.f32 0.0, %v1341
        %v1343 = vpop.f32.mrb[0].mxu0
        %v1344 = vpop.f32.mrb[0].mxu0
        %v1345 = vpop.f32.mrb[0].mxu0
        %1346 = vdwg.mxu0
        %v1347 = vsel %vm854, %v1342, -inf
        %1348 = vmax.xlane.f32.xlu0 %v1347
        %v1349 = vpop.xlane.xlu0 %1348
        %v1350 = vsub.f32 %v1342, %v1349
        %v1351 = vmul.f32 %v1350, 1.442695
        %v1352 = vpow.pop %v1351
        %v1353 = vsel %vm854, %v1352, 0.0
        %1354 = vadd.xlane.f32.xlu0 %v1353
        %v1355 = vpop.xlane.xlu0 %1354
        %v1356 = vrcp.pop %v1355
        %v1357 = vmul.f32 %v1352, %v1356
        %s1358 = scalar_lea.vmem %s563, 24 [#allocation11]
        %1359 = vst.msk [vmem:[%s1358] sm:$0xff] %vm854, %v1357
        %v1360 = vpack.c.bf16 %v1357, %v1357
        %1361 = vrot.lane.b32.xlu0 %v986, 80
        %v1362 = vpop.permute.xlu0 %1361
        %v1364 = vsel %vm854, %v1360, 0
        %v1367 = vsel %vm871, %v1362, 0
        %1369 = vmatprep.subr.bf16.mxu0 0
        %1370 = vmatpush1.bf16.msra.mxu0 %v1367
        %1371 = vmatprep.subr.bf16.mxu0 0
        %1372 = vmatpush1.bf16.msra.mxu0 0
        %1373 = vmatprep.subr.bf16.mxu0 0
        %1374 = vmatpush1.bf16.msra.mxu0 0
        %1375 = vmatprep.subr.bf16.mxu0 0
        %1376 = vmatpush1.bf16.msra.mxu0 0
        %1377 = vmatprep.subr.bf16.mxu0 0
        %1378 = vmatpush1.bf16.msra.mxu0 0
        %1379 = vmatprep.subr.bf16.mxu0 0
        %1380 = vmatpush1.bf16.msra.mxu0 0
        %1381 = vmatprep.subr.bf16.mxu0 0
        %1382 = vmatpush1.bf16.msra.mxu0 0
        %1383 = vmatprep.subr.bf16.mxu0 0
        %1384 = vmatpush1.bf16.msra.mxu0 0
        %1385 = vmatprep.subr.bf16.mxu0 0
        %1386 = vmatpush1.bf16.msra.mxu0 0
        %1387 = vmatprep.subr.bf16.mxu0 0
        %1388 = vmatpush1.bf16.msra.mxu0 0
        %1389 = vmatprep.subr.bf16.mxu0 0
        %1390 = vmatpush1.bf16.msra.mxu0 0
        %1391 = vmatprep.subr.bf16.mxu0 0
        %1392 = vmatpush1.bf16.msra.mxu0 0
        %1393 = vmatprep.subr.bf16.mxu0 0
        %1394 = vmatpush1.bf16.msra.mxu0 0
        %1395 = vmatprep.subr.bf16.mxu0 0
        %1396 = vmatpush1.bf16.msra.mxu0 0
        %1397 = vmatprep.subr.bf16.mxu0 0
        %1398 = vmatpush1.bf16.msra.mxu0 0
        %1399 = vmatprep.subr.bf16.mxu0 0
        %1400 = vmatpush1.bf16.msra.mxu0 0
        %1401 = vmatprep.mubr.bf16.mxu0 0
        %1402 = vmatmul.mubr.bf16.gmra.mrb[0].mxu0 %v1364
        %v1403 = vpop.f32.mrb[0].mxu0
        %v1404 = vadd.f32 0.0, %v1403
        %v1405 = vpop.f32.mrb[0].mxu0
        %v1406 = vpop.f32.mrb[0].mxu0
        %v1407 = vpop.f32.mrb[0].mxu0
        %1408 = vdwg.mxu0
        %v1409 = vpack.c.bf16 %v1404, %v1404
        %v1412 = vunpack.c.l.b16 %v805
        %v1413 = vunpack.c.l.b16 %v806
        %v1414 = vpack.c.b16 %v1413, %v1412
        %v1417 = vsel %vm807, %v1409, 0
        %1419 = vmatprep.subr.bf16.mxu0 0
        %1420 = vmatpush1.bf16.msra.mxu0 %v1414
        %1421 = vmatprep.subr.bf16.mxu0 0
        %1422 = vmatpush1.bf16.msra.mxu0 0
        %1423 = vmatprep.subr.bf16.mxu0 0
        %1424 = vmatpush1.bf16.msra.mxu0 0
        %1425 = vmatprep.subr.bf16.mxu0 0
        %1426 = vmatpush1.bf16.msra.mxu0 0
        %1427 = vmatprep.subr.bf16.mxu0 0
        %1428 = vmatpush1.bf16.msra.mxu0 0
        %1429 = vmatprep.subr.bf16.mxu0 0
        %1430 = vmatpush1.bf16.msra.mxu0 0
        %1431 = vmatprep.subr.bf16.mxu0 0
        %1432 = vmatpush1.bf16.msra.mxu0 0
        %1433 = vmatprep.subr.bf16.mxu0 0
        %1434 = vmatpush1.bf16.msra.mxu0 0
        %1435 = vmatprep.subr.bf16.mxu0 0
        %1436 = vmatpush1.bf16.msra.mxu0 0
        %1437 = vmatprep.subr.bf16.mxu0 0
        %1438 = vmatpush1.bf16.msra.mxu0 0
        %1439 = vmatprep.subr.bf16.mxu0 0
        %1440 = vmatpush1.bf16.msra.mxu0 0
        %1441 = vmatprep.subr.bf16.mxu0 0
        %1442 = vmatpush1.bf16.msra.mxu0 0
        %1443 = vmatprep.subr.bf16.mxu0 0
        %1444 = vmatpush1.bf16.msra.mxu0 0
        %1445 = vmatprep.subr.bf16.mxu0 0
        %1446 = vmatpush1.bf16.msra.mxu0 0
        %1447 = vmatprep.subr.bf16.mxu0 0
        %1448 = vmatpush1.bf16.msra.mxu0 0
        %1449 = vmatprep.subr.bf16.mxu0 0
        %1450 = vmatpush1.bf16.msra.mxu0 0
        %1451 = vmatprep.mubr.bf16.mxu0 0
        %1452 = vmatmul.mubr.bf16.gmra.mrb[0].mxu0 %v1417
        %v1453 = vpop.f32.mrb[0].mxu0
        %v1454 = vadd.f32 0.0, %v1453
        %v1455 = vpop.f32.mrb[0].mxu0
        %v1456 = vpop.f32.mrb[0].mxu0
        %v1457 = vpop.f32.mrb[0].mxu0
        %1458 = vdwg.mxu0
        %v1459 = vadd.f32 %v1296, %v1454
        %v1460 = vld [vmem:[%s10] sm:$0x1]
        %v1462 = vlaneseq
        %v1463 = vshrl.u32 %v1462, 7
        %v1464 = vsub.s32 0, %v1463
        %v1465 = vrot.slane %v1460, %v1464
        %v1467 = vadd.f32 %v1459, %v1465
        %v1468 = vadd.f32 %v726, %v1467
        %v1469 = vsel %vm751, %v1468, 0.0
        %1470 = vadd.xlane.f32.xlu0 %v1469
        %v1471 = vpop.xlane.xlu0 %1470
        %v1472 = vrcp.pop 32.0
        %v1473 = vmul.f32 %v1471, %v1472
        %v1474 = vsub.f32 %v1468, %v1473
        %v1475 = vmul.f32 %v1474, %v1474
        %v1476 = vsel %vm751, %v1475, 0.0
        %1477 = vadd.xlane.f32.xlu0 %v1476
        %v1478 = vpop.xlane.xlu0 %1477
        %v1479 = vmul.f32 %v1478, %v1472
        %v1480 = vadd.f32 %v1479, 1e-05
        %v1481 = vrsqrt.pop %v1480
        %v1482 = vmul.f32 %v1474, %v1481
        %v1483 = vld [vmem:[%s11] sm:$0x1]
        %v1485 = vlaneseq
        %v1486 = vshrl.u32 %v1485, 7
        %v1487 = vsub.s32 0, %v1486
        %v1488 = vrot.slane %v1483, %v1487
        %v1490 = vmul.f32 %v1482, %v1488
        %v1491 = vld [vmem:[%s12] sm:$0x1]
        %v1493 = vlaneseq
        %v1494 = vshrl.u32 %v1493, 7
        %v1495 = vsub.s32 0, %v1494
        %v1496 = vrot.slane %v1491, %v1495
        %v1498 = vadd.f32 %v1490, %v1496
        %1499 = vst.msk [vmem:[%s556] sm:$0xff] %vm751, %v1498
        %s1500 = sand.u32 %s346, 1
        %s1501 = scalar_lea.sflag [#allocation6], %s1500
        %s1502 = sand.u32 %s346, 1
        %s1503 = smul.addr %s1502, 8
        %s1504 = scalar_lea.vmem [#allocation10], %s1503
        %s1505 = sand.u32 %s374, 1
        %s1506 = scalar_lea.sflag [#allocation12], %s1505
        %s1507 = sand.u32 %s374, 1
        %s1508 = smul.addr %s1507, 32
        %s1509 = scalar_lea.vmem [#allocation11], %s1508
        // Predicated region
        $region89: #{tpu_custom_call.1} parent=71 // pred_check
          %p1510 = pneg %p356
        $region90: #{tpu_custom_call.1} parent=71 // pred_check_branch
          %1512 = sbr.rel (%p1510) target = $region92
        $region91: #{tpu_custom_call.1} parent=71 // pred_region
          %s1514 = ssub.s32 128, 128
          %1515 = vsyncadd %s1501, %s1514
          %s1516 = sadd.s32 %s39, %s38
          %s1517 = smul.addr %s1516, 128
          %s1518 = scalar_lea.hbm %s13, %s1517
          %s1520 = sshll.u32 %s1504, 4
          %s1521 = int_to_ptr.vmem [resolvable:$true] %s1520
          %1523 = dma.vmem_to_hbm [thread:$0]  %s1521, 128, %s1518, %s1501
        $region92: #{tpu_custom_call.1} parent=71 // pred_fallthru
          _
        // Predicated region
        $region93: #{tpu_custom_call.1} parent=71 // pred_check
          %p1524 = pneg %p384
        $region94: #{tpu_custom_call.1} parent=71 // pred_check_branch
          %1526 = sbr.rel (%p1524) target = $region96
        $region95: #{tpu_custom_call.1} parent=71 // pred_region
          %s1528 = ssub.s32 512, 512
          %1529 = vsyncadd %s1506, %s1528
          %s1530 = smul.addr %s38, 4
          %s1531 = sadd.s32 %s39, %s1530
          %s1532 = smul.addr %s1531, 128
          %s1533 = scalar_lea.hbm %s14, %s1532
          %s1534 = sshll.u32 %s1509, 4
          %s1535 = int_to_ptr.vmem [resolvable:$true] %s1534
          %1540 = dma.vmem_to_hbm [thread:$0]  %s1535, 512, %s1533, %s1506, 128, 128, 8
        $region96: #{tpu_custom_call.1} parent=71 // pred_fallthru
          _
      $region72: #{tpu_custom_call.1} parent=5 // pred_fallthru
        _
      %p1541 = scmp.le.s32.totalorder 2, %s29
      // Predicated region
      $region97: #{tpu_custom_call.1} parent=5 // pred_check
        %p1542 = pneg %p1541
      $region98: #{tpu_custom_call.1} parent=5 // pred_check_branch
        %1544 = sbr.rel (%p1542) target = $region100
      $region99: #{tpu_custom_call.1} parent=5 // pred_region
        %s1545 = ssub.s32 %s29, 2
        // Predicated region
        $region101: #{tpu_custom_call.1} parent=99 // pred_check
          %p1546 = pneg %p362
        $region102: #{tpu_custom_call.1} parent=99 // pred_check_branch
          %1548 = sbr.rel (%p1546) target = $region104
        $region103: #{tpu_custom_call.1} parent=99 // pred_region
          %s1549 = sand.u32 %s347, 1
          %s1550 = scalar_lea.sflag [#allocation6], %s1549
          %s1551 = sand.u32 %s347, 1
          %s1552 = smul.addr %s1551, 8
          %s1553 = scalar_lea.vmem [#allocation10], %s1552
          %1554 = dma.done %s1550, 128
        $region104: #{tpu_custom_call.1} parent=99 // pred_fallthru
          _
        // Predicated region
        $region105: #{tpu_custom_call.1} parent=99 // pred_check
          %p1555 = pneg %p390
        $region106: #{tpu_custom_call.1} parent=99 // pred_check_branch
          %1557 = sbr.rel (%p1555) target = $region108
        $region107: #{tpu_custom_call.1} parent=99 // pred_region
          %s1558 = sand.u32 %s375, 1
          %s1559 = scalar_lea.sflag [#allocation12], %s1558
          %s1560 = sand.u32 %s375, 1
          %s1561 = smul.addr %s1560, 32
          %s1562 = scalar_lea.vmem [#allocation11], %s1561
          %1563 = dma.done %s1559, 512
        $region108: #{tpu_custom_call.1} parent=99 // pred_fallthru
          _
      $region100: #{tpu_custom_call.1} parent=5 // pred_fallthru
        _
    $region6: #{tpu_custom_call.1} parent=1 // loop_footer
      %s33 = sadd.s32 1, %s29
    $region7: #{tpu_custom_call.1} parent=1 // loop_footer_branch
      %28 = sbr.rel target = $region3
    $region8: #{tpu_custom_call.1} parent=1 // loop_exit
      _
    %1564 = vsyncpa [#allocation5], 1
    %s1565 = scalar_lea.sflag [#allocation5], 1
    %1566 = vsyncpa %s1565, 1
    %1567 = vsyncpa [#allocation8], 1
    %1568 = vsyncpa [#allocation6], 1
    %s1569 = scalar_lea.sflag [#allocation6], 1
    %1570 = vsyncpa %s1569, 1
    %1571 = vsyncpa [#allocation12], 1
    %s1572 = scalar_lea.sflag [#allocation12], 1
    %1573 = vsyncpa %s1572, 1

</llo_original>
